<compile_context>
chip_gen: v7x
topology: tpu7x:2x2x1
jax: 0.10.0
libtpu: 0.0.40
codegen_flags: <defaults>
</compile_context>

<pallas_src>
import functools

import jax
import jax.numpy as jnp
from jax.experimental import pallas as pl
from jax.experimental.pallas import tpu as pltpu

HIDDEN = 256


# ----------------------------- Pallas kernel -------------------------------
def _sac_critic_kernel(obsT_ref, acT_ref, w1o_ref, w1a_ref, b1_ref,
                       w2t_ref, b2_ref, w3_ref, b3_ref, o_ref,
                       *, discrete, ac_dim):
    # obsT_ref: (obs_dim, TB) bf16   -- batch on the lane axis
    # acT_ref : (ac_dim, TB) bf16 (continuous) or (1, TB) int32 (discrete)
    # w1o/w1a : (H, obs_dim) / (H, ac_dim) bf16, w2t: (H, H) bf16
    # b1/b2   : (H, 1) f32, w3: (H, 1) f32, b3: (1, 1) f32
    obsT = obsT_ref[...]

    if discrete:
        # Fuse torch's scatter_-based one-hot: build it in-kernel from the
        # prefetched index row with a sublane iota compare.
        idx = acT_ref[...]                                        # (1, TB) i32
        rows = jax.lax.broadcasted_iota(jnp.int32, (ac_dim, idx.shape[1]), 0)
        acT = jnp.where(rows == idx, 1.0, 0.0).astype(jnp.bfloat16)
    else:
        acT = acT_ref[...]                                        # (ac_dim, TB)

    # fc1 + relu : split contraction (obs part + ac part), f32 MXU accumulation
    h1 = jnp.dot(w1o_ref[...], obsT, preferred_element_type=jnp.float32)
    h1 = h1 + jnp.dot(w1a_ref[...], acT, preferred_element_type=jnp.float32)
    h1 = jnp.maximum(h1 + b1_ref[...], 0.0)

    # fc2 + relu : (H, H) @ (H, TB) -> (H, TB)
    h2 = jnp.dot(w2t_ref[...], h1.astype(jnp.bfloat16),
                 preferred_element_type=jnp.float32)
    h2 = jnp.maximum(h2 + b2_ref[...], 0.0)

    # fc3 as VPU multiply + sublane (XLU) reduce -> lane-dense (1, TB) output.
    # TODO(synk): on v6e/v7x (VPU-bound epilogue) an MXU (1,H)@(H,TB) bf16 fc3
    # plus bf16 ReLU may be faster; kept the v5e-safe f32 VPU path here.
    q = jnp.sum(h2 * w3_ref[...], axis=0, keepdims=True) + b3_ref[...]
    o_ref[...] = q


# ------------------------------- wrapper ------------------------------------
def _choose_batch_tile(batch, max_tile):
    """Lane-aligned batch tile; >= 2 tiles for large B (v7x megacore)."""
    if batch <= 256:
        return batch                           # full-dim block is always legal
    half = ((batch + 1) // 2) // 128 * 128     # round_down_128(cdiv(B, 2))
    return max(128, min(max_tile, half))


def sac_critic_forward(obs, ac, kparams, *, discrete, ac_dim, batch_tile=2048):
    """Pallas-backed SAC_Critic.forward. Returns (B,) float32 Q-values."""
    B, obs_dim = obs.shape
    H = kparams["w2t"].shape[0]

    # Features-first so batch lands on the 128-lane axis.  Only small per-array
    # transposes/casts remain in the wrapper; the (B, D) one_hot/concat HBM
    # round trips are gone.
    obsT = obs.T.astype(jnp.bfloat16)                           # (obs_dim, B)
    if discrete:
        acT = ac.reshape(1, B).astype(jnp.int32)                # (1, B) indices
        ac_rows = 1
    else:
        acT = ac.T.astype(jnp.bfloat16)                         # (ac_dim, B)
        ac_rows = ac_dim

    tb = _choose_batch_tile(B, max(128, (batch_tile // 128) * 128))
    grid = (pl.cdiv(B, tb),)

    # VMEM budget: f32 intermediates + double-buffered streaming blocks +
    # resident weights; capped at 48 MiB (below v7x's 64 MiB physical VMEM).
    per_col = 2 * H * 4 + H * 2                 # h1/h2 f32 + h1 bf16 cast
    per_col += 2 * obs_dim * 2                  # obs^T block (x2 buffers)
    per_col += 2 * ac_rows * 4                  # ac^T / index block (x2 buffers)
    per_col += 2 * 4                            # (1, tb) f32 output (x2 buffers)
    weights = 2 * (H * H * 2 + H * (obs_dim + ac_dim) * 2 + 3 * H * 4 + 4)
    est = tb * per_col + weights + (1 << 20)
    vmem_limit = int(min(48 * 2**20, max(32 * 2**20, 2 * est)))

    kernel = functools.partial(_sac_critic_kernel, discrete=discrete,
                               ac_dim=ac_dim)

    # TODO(synk): single-buffering the constant weight/bias blocks
    # (pipeline_mode=pl.Buffered(1)) and moving b3 to SMEM would free ~150 KiB
    # more VMEM headroom; omitted as a minor win.
    out = pl.pallas_call(
        kernel,
        out_shape=jax.ShapeDtypeStruct((1, B), jnp.float32),
        grid_spec=pltpu.PrefetchScalarGridSpec(
            num_scalar_prefetch=0,
            grid=grid,
            in_specs=[
                pl.BlockSpec((obs_dim, tb), lambda i: (0, i)),   # obs^T tile
                pl.BlockSpec((ac_rows, tb), lambda i: (0, i)),   # ac^T / indices
                pl.BlockSpec((H, obs_dim), lambda i: (0, 0)),    # w1^T (obs part)
                pl.BlockSpec((H, ac_dim), lambda i: (0, 0)),     # w1^T (ac part)
                pl.BlockSpec((H, 1), lambda i: (0, 0)),          # b1
                pl.BlockSpec((H, H), lambda i: (0, 0)),          # w2^T
                pl.BlockSpec((H, 1), lambda i: (0, 0)),          # b2
                pl.BlockSpec((H, 1), lambda i: (0, 0)),          # w3 (column)
                pl.BlockSpec((1, 1), lambda i: (0, 0)),          # b3
            ],
            out_specs=pl.BlockSpec((1, tb), lambda i: (0, i)),   # lane-dense out
        ),
        compiler_params=pltpu.CompilerParams(
            dimension_semantics=("parallel",),
            vmem_limit_bytes=vmem_limit),
    )(obsT, acT, kparams["w1t_obs"], kparams["w1t_ac"], kparams["b1"],
      kparams["w2t"], kparams["b2"], kparams["w3"], kparams["b3"])

    return out[0]                                                # (B,)


# --------------------------- parameter init --------------------------------
def init_sac_critic_params(key, obs_dim, ac_dim, hidden=HIDDEN):
    """nn.Linear-style U(-1/sqrt(fan_in), 1/sqrt(fan_in)) init, stored in the
    kernel layout: weights (out, in) bf16 with fc1 split into obs/ac parts,
    biases (out, 1) f32, fc3 weight as an (H, 1) f32 column."""
    d_in = obs_dim + ac_dim
    ks = jax.random.split(key, 6)

    def lin(kw, kb, fan_in, fan_out):
        bound = 1.0 / jnp.sqrt(fan_in)
        w = jax.random.uniform(kw, (fan_out, fan_in), jnp.float32, -bound, bound)
        b = jax.random.uniform(kb, (fan_out, 1), jnp.float32, -bound, bound)
        return w, b

    w1, b1 = lin(ks[0], ks[1], d_in, hidden)
    w2, b2 = lin(ks[2], ks[3], hidden, hidden)
    w3, b3 = lin(ks[4], ks[5], hidden, 1)
    return {
        "w1t_obs": w1[:, :obs_dim].astype(jnp.bfloat16),   # (H, obs_dim)
        "w1t_ac": w1[:, obs_dim:].astype(jnp.bfloat16),    # (H, ac_dim)
        "b1": b1,                                          # (H, 1) f32
        "w2t": w2.astype(jnp.bfloat16),                    # (H, H)
        "b2": b2,                                          # (H, 1) f32
        "w3": w3.T.astype(jnp.float32),                    # (H, 1) f32 column
        "b3": b3,                                          # (1, 1) f32
    }


# ------------------ pure-JAX reference (matched precision) ------------------
def _reference(obs, ac, kp, discrete, ac_dim):
    if discrete:
        acT = jax.nn.one_hot(ac, ac_dim, dtype=jnp.float32).T.astype(jnp.bfloat16)
    else:
        acT = ac.T.astype(jnp.bfloat16)
    obsT = obs.T.astype(jnp.bfloat16)
    h1 = (jnp.dot(kp["w1t_obs"], obsT, preferred_element_type=jnp.float32)
          + jnp.dot(kp["w1t_ac"], acT, preferred_element_type=jnp.float32))
    h1 = jnp.maximum(h1 + kp["b1"], 0.0)
    h2 = jnp.dot(kp["w2t"], h1.astype(jnp.bfloat16),
                 preferred_element_type=jnp.float32)
    h2 = jnp.maximum(h2 + kp["b2"], 0.0)
    q = jnp.sum(h2 * kp["w3"], axis=0) + kp["b3"][0, 0]
    return q                                               # (B,)


if __name__ == "__main__":
    key = jax.random.PRNGKey(0)
    k_param, k_obs, k_ac, k_acc = jax.random.split(key, 4)

    obs_dim, ac_dim, batch = 16, 6, 8

    params = init_sac_critic_params(k_param, obs_dim, ac_dim)
    obs = jax.random.normal(k_obs, (batch, obs_dim), jnp.float32)

    # --- discrete branch (integer action indices -> in-kernel one-hot) ---
    ac_idx = jax.random.randint(k_ac, (batch,), 0, ac_dim, jnp.int32)
    q_disc = sac_critic_forward(obs, ac_idx, params, discrete=True, ac_dim=ac_dim)
    jax.block_until_ready(q_disc)
    ref_disc = _reference(obs, ac_idx, params, True, ac_dim)

    # --- continuous branch (dense actions) ---
    ac_cont = jax.random.normal(k_acc, (batch, ac_dim), jnp.float32)
    q_cont = sac_critic_forward(obs, ac_cont, params, discrete=False, ac_dim=ac_dim)
    jax.block_until_ready(q_cont)
    ref_cont = _reference(obs, ac_cont, params, False, ac_dim)

    assert q_disc.shape == (batch,) and q_cont.shape == (batch,)
    assert jnp.allclose(q_disc, ref_disc, atol=1e-3, rtol=1e-3)
    assert jnp.allclose(q_cont, ref_cont, atol=1e-3, rtol=1e-3)

    print("KERNEL_OK")
</pallas_src>

<mosaic_0001>
module attributes {stable_mosaic.version = 11 : i64} {
  func.func @_sac_critic_kernel(%arg0: i32, %arg1: memref<16x8xbf16, #tpu.memory_space<vmem>>, %arg2: memref<1x8xi32, #tpu.memory_space<vmem>>, %arg3: memref<256x16xbf16, #tpu.memory_space<vmem>>, %arg4: memref<256x6xbf16, #tpu.memory_space<vmem>>, %arg5: memref<256x1xf32, #tpu.memory_space<vmem>>, %arg6: memref<256x256xbf16, #tpu.memory_space<vmem>>, %arg7: memref<256x1xf32, #tpu.memory_space<vmem>>, %arg8: memref<256x1xf32, #tpu.memory_space<vmem>>, %arg9: memref<1x1xf32, #tpu.memory_space<vmem>>, %arg10: memref<1x8xf32, #tpu.memory_space<vmem>>) attributes {dimension_semantics = [#tpu.dimension_semantics<parallel>], iteration_bounds = array<i64: 1>, scalar_prefetch = 0 : i64, scratch_operands = 0 : i64, tpu.core_type = #tpu.core_type<tc>, window_params = [{transform_indices = @transform_0, window_bounds = array<i64: 16, 8>}, {transform_indices = @transform_1, window_bounds = array<i64: 1, 8>}, {pipeline_mode = #tpu.pipeline_mode<synchronous>, transform_indices = @transform_2, window_bounds = array<i64: 256, 16>}, {pipeline_mode = #tpu.pipeline_mode<synchronous>, transform_indices = @transform_3, window_bounds = array<i64: 256, 6>}, {pipeline_mode = #tpu.pipeline_mode<synchronous>, transform_indices = @transform_4, window_bounds = array<i64: 256, 1>}, {pipeline_mode = #tpu.pipeline_mode<synchronous>, transform_indices = @transform_5, window_bounds = array<i64: 256, 256>}, {pipeline_mode = #tpu.pipeline_mode<synchronous>, transform_indices = @transform_6, window_bounds = array<i64: 256, 1>}, {pipeline_mode = #tpu.pipeline_mode<synchronous>, transform_indices = @transform_7, window_bounds = array<i64: 256, 1>}, {pipeline_mode = #tpu.pipeline_mode<synchronous>, transform_indices = @transform_8, window_bounds = array<i64: 1, 1>}, {transform_indices = @transform_9, window_bounds = array<i64: 1, 8>}]} {
    %c0 = arith.constant 0 : index
    %c0_0 = arith.constant 0 : index
    %0 = vector.load %arg1[%c0, %c0_0] : memref<16x8xbf16, #tpu.memory_space<vmem>>, vector<16x8xbf16>
    %c0_1 = arith.constant 0 : index
    %c0_2 = arith.constant 0 : index
    %1 = vector.load %arg2[%c0_1, %c0_2] : memref<1x8xi32, #tpu.memory_space<vmem>>, vector<1x8xi32>
    %2 = tpu.iota {dimensions = array<i32: 0>} : vector<6x8xi32>
    %3 = vector.broadcast %1 : vector<1x8xi32> to vector<6x8xi32>
    %4 = arith.cmpi eq, %2, %3 : vector<6x8xi32>
    %cst = arith.constant 1.000000e+00 : f32
    %cst_3 = arith.constant 0.000000e+00 : f32
    %5 = vector.broadcast %cst : f32 to vector<6x8xf32>
    %6 = vector.broadcast %cst_3 : f32 to vector<6x8xf32>
    %7 = arith.select %4, %5, %6 : vector<6x8xi1>, vector<6x8xf32>
    %8 = arith.truncf %7 : vector<6x8xf32> to vector<6x8xbf16>
    %c0_4 = arith.constant 0 : index
    %c0_5 = arith.constant 0 : index
    %9 = vector.load %arg3[%c0_4, %c0_5] : memref<256x16xbf16, #tpu.memory_space<vmem>>, vector<256x16xbf16>
    %cst_6 = arith.constant dense<0.000000e+00> : vector<256x8xf32>
    %10 = tpu.matmul %9, %0, %cst_6 {dimension_numbers = #tpu.dot_dimension_numbers<[1], [0], [0], [1], [0, 0, 1, 1], [], []>} : vector<256x16xbf16>, vector<16x8xbf16>, vector<256x8xf32> -> vector<256x8xf32>
    %c0_7 = arith.constant 0 : index
    %c0_8 = arith.constant 0 : index
    %11 = vector.load %arg4[%c0_7, %c0_8] : memref<256x6xbf16, #tpu.memory_space<vmem>>, vector<256x6xbf16>
    %cst_9 = arith.constant dense<0.000000e+00> : vector<256x8xf32>
    %12 = tpu.matmul %11, %8, %cst_9 {dimension_numbers = #tpu.dot_dimension_numbers<[1], [0], [0], [1], [0, 0, 1, 1], [], []>} : vector<256x6xbf16>, vector<6x8xbf16>, vector<256x8xf32> -> vector<256x8xf32>
    %13 = arith.addf %10, %12 : vector<256x8xf32>
    %c0_10 = arith.constant 0 : index
    %c0_11 = arith.constant 0 : index
    %14 = vector.load %arg5[%c0_10, %c0_11] : memref<256x1xf32, #tpu.memory_space<vmem>>, vector<256x1xf32>
    %15 = vector.broadcast %14 : vector<256x1xf32> to vector<256x8xf32>
    %16 = arith.addf %13, %15 : vector<256x8xf32>
    %cst_12 = arith.constant 0.000000e+00 : f32
    %17 = vector.broadcast %cst_12 : f32 to vector<256x8xf32>
    %18 = arith.maximumf %16, %17 : vector<256x8xf32>
    %c0_13 = arith.constant 0 : index
    %c0_14 = arith.constant 0 : index
    %19 = vector.load %arg6[%c0_13, %c0_14] : memref<256x256xbf16, #tpu.memory_space<vmem>>, vector<256x256xbf16>
    %20 = arith.truncf %18 : vector<256x8xf32> to vector<256x8xbf16>
    %cst_15 = arith.constant dense<0.000000e+00> : vector<256x8xf32>
    %21 = tpu.matmul %19, %20, %cst_15 {dimension_numbers = #tpu.dot_dimension_numbers<[1], [0], [0], [1], [0, 0, 1, 1], [], []>} : vector<256x256xbf16>, vector<256x8xbf16>, vector<256x8xf32> -> vector<256x8xf32>
    %c0_16 = arith.constant 0 : index
    %c0_17 = arith.constant 0 : index
    %22 = vector.load %arg7[%c0_16, %c0_17] : memref<256x1xf32, #tpu.memory_space<vmem>>, vector<256x1xf32>
    %23 = vector.broadcast %22 : vector<256x1xf32> to vector<256x8xf32>
    %24 = arith.addf %21, %23 : vector<256x8xf32>
    %cst_18 = arith.constant 0.000000e+00 : f32
    %25 = vector.broadcast %cst_18 : f32 to vector<256x8xf32>
    %26 = arith.maximumf %24, %25 : vector<256x8xf32>
    %c0_19 = arith.constant 0 : index
    %c0_20 = arith.constant 0 : index
    %27 = vector.load %arg8[%c0_19, %c0_20] : memref<256x1xf32, #tpu.memory_space<vmem>>, vector<256x1xf32>
    %28 = vector.broadcast %27 : vector<256x1xf32> to vector<256x8xf32>
    %29 = arith.mulf %26, %28 : vector<256x8xf32>
    %cst_21 = arith.constant dense<0.000000e+00> : vector<8xf32>
    %30 = vector.multi_reduction <add>, %29, %cst_21 [0] : vector<256x8xf32> to vector<8xf32>
    %31 = vector.shape_cast %30 : vector<8xf32> to vector<1x8xf32>
    %c0_22 = arith.constant 0 : index
    %c0_23 = arith.constant 0 : index
    %32 = vector.load %arg9[%c0_22, %c0_23] : memref<1x1xf32, #tpu.memory_space<vmem>>, vector<1x1xf32>
    %33 = vector.broadcast %32 : vector<1x1xf32> to vector<1x8xf32>
    %34 = arith.addf %31, %33 : vector<1x8xf32>
    %c0_24 = arith.constant 0 : index
    %c0_25 = arith.constant 0 : index
    %35 = vector.load %arg10[%c0_24, %c0_25] : memref<1x8xf32, #tpu.memory_space<vmem>>, vector<1x8xf32>
    tpu.vector_store %arg10[%c0_24, %c0_25], %34 {strides = array<i32>} : memref<1x8xf32, #tpu.memory_space<vmem>>, vector<1x8xf32>,
    return
  }
  func.func @transform_0(%arg0: i32) -> (i32, i32) {
    %c0_i32 = arith.constant 0 : i32
    %c0_i32_0 = arith.constant 0 : i32
    return %c0_i32, %arg0 : i32, i32
  }
  func.func @transform_1(%arg0: i32) -> (i32, i32) {
    %c0_i32 = arith.constant 0 : i32
    %c0_i32_0 = arith.constant 0 : i32
    return %c0_i32, %arg0 : i32, i32
  }
  func.func @transform_2(%arg0: i32) -> (i32, i32) {
    %c0_i32 = arith.constant 0 : i32
    %c0_i32_0 = arith.constant 0 : i32
    %c0_i32_1 = arith.constant 0 : i32
    return %c0_i32, %c0_i32_0 : i32, i32
  }
  func.func @transform_3(%arg0: i32) -> (i32, i32) {
    %c0_i32 = arith.constant 0 : i32
    %c0_i32_0 = arith.constant 0 : i32
    %c0_i32_1 = arith.constant 0 : i32
    return %c0_i32, %c0_i32_0 : i32, i32
  }
  func.func @transform_4(%arg0: i32) -> (i32, i32) {
    %c0_i32 = arith.constant 0 : i32
    %c0_i32_0 = arith.constant 0 : i32
    %c0_i32_1 = arith.constant 0 : i32
    return %c0_i32, %c0_i32_0 : i32, i32
  }
  func.func @transform_5(%arg0: i32) -> (i32, i32) {
    %c0_i32 = arith.constant 0 : i32
    %c0_i32_0 = arith.constant 0 : i32
    %c0_i32_1 = arith.constant 0 : i32
    return %c0_i32, %c0_i32_0 : i32, i32
  }
  func.func @transform_6(%arg0: i32) -> (i32, i32) {
    %c0_i32 = arith.constant 0 : i32
    %c0_i32_0 = arith.constant 0 : i32
    %c0_i32_1 = arith.constant 0 : i32
    return %c0_i32, %c0_i32_0 : i32, i32
  }
  func.func @transform_7(%arg0: i32) -> (i32, i32) {
    %c0_i32 = arith.constant 0 : i32
    %c0_i32_0 = arith.constant 0 : i32
    %c0_i32_1 = arith.constant 0 : i32
    return %c0_i32, %c0_i32_0 : i32, i32
  }
  func.func @transform_8(%arg0: i32) -> (i32, i32) {
    %c0_i32 = arith.constant 0 : i32
    %c0_i32_0 = arith.constant 0 : i32
    %c0_i32_1 = arith.constant 0 : i32
    return %c0_i32, %c0_i32_0 : i32, i32
  }
  func.func @transform_9(%arg0: i32) -> (i32, i32) {
    %c0_i32 = arith.constant 0 : i32
    %c0_i32_0 = arith.constant 0 : i32
    return %c0_i32, %arg0 : i32, i32
  }
}

</mosaic_0001>

<llo_original>
// kernel: tpu_custom_call.1
$region0: #{tpu_custom_call.1}
  #allocation0 [shape = 'u32[]', space=smem, size = 0x4, offset = 0x4, fixed_abs, tag = 'smem constant byte address 0x4 - core index']
  #allocation1 [shape = 'u32[144,128]{1,0:T(1,128)}', space=vmem, size = 0x12000, scoped, tag = 'internal scratch']
  #allocation2 [shape = 'f32[1,1]{1,0:T(1,128)S(1)}', space=vmem, size = 0x200, scoped, tag = 'scoped memory for tpu_custom_call.1']
  %s0 = inlined_call_operand.vmem [shape: bf16[16,8], index: 0, kind: input, shape index: {}]
  %s1 = inlined_call_operand.vmem [shape: s32[1,8], index: 1, kind: input, shape index: {}]
  %s2 = inlined_call_operand.vmem [shape: bf16[256,16], index: 2, kind: input, shape index: {}]
  %s3 = inlined_call_operand.vmem [shape: bf16[256,6], index: 3, kind: input, shape index: {}]
  %s4 = inlined_call_operand.vmem [shape: f32[256,1], index: 4, kind: input, shape index: {}]
  %s5 = inlined_call_operand.vmem [shape: bf16[256,256], index: 5, kind: input, shape index: {}]
  %s6 = inlined_call_operand.vmem [shape: f32[256,1], index: 6, kind: input, shape index: {}]
  %s7 = inlined_call_operand.vmem [shape: f32[256,1], index: 7, kind: input, shape index: {}]
  %s8 = inlined_call_operand.<no memory space> [shape: f32[1,1], index: 8, kind: input, shape index: {}]
  %s9 = inlined_call_operand.hbm [shape: f32[1,8], index: 9, kind: output, shape index: {}]
  %s10 = sld [smem:[#allocation0]]
  $region46: #{tpu_custom_call.1} parent=0
    _
  %s12 = ssub.s32 1, %s10
  %s13 = scalar_select 0, %s12, %s10
  %v14 = vstv %s8
  %15 = vst [vmem:[#allocation2] sm:$0x1] %v14
  $region1: #{tpu_custom_call.1} parent=0
    #allocation3 [shape = 'u8[512]{0}', space=vmem, size = 0x400, scoped, tag = 'output window, operand 0, single buffered']
    #allocation4 [shape = 's32[1]{0}', space=sflag, size = 0x4, scoped, tag = 'scoped memory for tpu_custom_call.1']
    %16 = vsyncpa [#allocation4], 0
    // Predicated region
    $region2: #{tpu_custom_call.1} parent=1 // pred_check
      _
    $region3: #{tpu_custom_call.1} parent=1 // pred_check_branch
      %18 = sbr.rel (0) target = $region5
    $region4: #{tpu_custom_call.1} parent=1 // pred_region
      _
    $region5: #{tpu_custom_call.1} parent=1 // pred_fallthru
      _
    // Predicated region
    $region6: #{tpu_custom_call.1} parent=1 // pred_check
      _
    $region7: #{tpu_custom_call.1} parent=1 // pred_check_branch
      %20 = sbr.rel (0) target = $region9
    $region8: #{tpu_custom_call.1} parent=1 // pred_region
      _
    $region9: #{tpu_custom_call.1} parent=1 // pred_fallthru
      _
    // Predicated region
    $region10: #{tpu_custom_call.1} parent=1 // pred_check
      _
    $region11: #{tpu_custom_call.1} parent=1 // pred_check_branch
      %22 = sbr.rel (0) target = $region13
    $region12: #{tpu_custom_call.1} parent=1 // pred_region
      _
    $region13: #{tpu_custom_call.1} parent=1 // pred_fallthru
      _
    // Predicated region
    $region14: #{tpu_custom_call.1} parent=1 // pred_check
      _
    $region15: #{tpu_custom_call.1} parent=1 // pred_check_branch
      %24 = sbr.rel (0) target = $region17
    $region16: #{tpu_custom_call.1} parent=1 // pred_region
      _
    $region17: #{tpu_custom_call.1} parent=1 // pred_fallthru
      _
    // Predicated region
    $region18: #{tpu_custom_call.1} parent=1 // pred_check
      _
    $region19: #{tpu_custom_call.1} parent=1 // pred_check_branch
      %26 = sbr.rel (0) target = $region21
    $region20: #{tpu_custom_call.1} parent=1 // pred_region
      _
    $region21: #{tpu_custom_call.1} parent=1 // pred_fallthru
      _
    // Predicated region
    $region22: #{tpu_custom_call.1} parent=1 // pred_check
      _
    $region23: #{tpu_custom_call.1} parent=1 // pred_check_branch
      %28 = sbr.rel (0) target = $region25
    $region24: #{tpu_custom_call.1} parent=1 // pred_region
      _
    $region25: #{tpu_custom_call.1} parent=1 // pred_fallthru
      _
    // Predicated region
    $region26: #{tpu_custom_call.1} parent=1 // pred_check
      _
    $region27: #{tpu_custom_call.1} parent=1 // pred_check_branch
      %30 = sbr.rel (0) target = $region29
    $region28: #{tpu_custom_call.1} parent=1 // pred_region
      _
    $region29: #{tpu_custom_call.1} parent=1 // pred_fallthru
      _
    // Predicated region
    $region30: #{tpu_custom_call.1} parent=1 // pred_check
      _
    $region31: #{tpu_custom_call.1} parent=1 // pred_check_branch
      %32 = sbr.rel (0) target = $region33
    $region32: #{tpu_custom_call.1} parent=1 // pred_region
      _
    $region33: #{tpu_custom_call.1} parent=1 // pred_fallthru
      _
    // Predicated region
    $region34: #{tpu_custom_call.1} parent=1 // pred_check
      _
    $region35: #{tpu_custom_call.1} parent=1 // pred_check_branch
      %34 = sbr.rel (0) target = $region37
    $region36: #{tpu_custom_call.1} parent=1 // pred_region
      _
    $region37: #{tpu_custom_call.1} parent=1 // pred_fallthru
      _
    %v36 = vld [vmem:[%s0] sm:$0xf]
    %v37 = vld [vmem:[%s0 + $0x4] sm:$0xf]
    %v38 = vld [vmem:[%s1] sm:$0x1]
    %v39 = vlaneseq
    %v40 = vshrl.u32 %v39, 7
    %v41 = vlaneseq
    %v42 = vshrl.u32 %v41, 7
    %v43 = vsub.s32 0, %v42
    %v44 = vrot.slane %v38, %v43
    %vm45 = vcmp.eq.s32.totalorder %v40, %v44
    %v46 = vsel %vm45, 1.0, 0.0
    %v47 = vpack.c.bf16 %v46, %v46
    %v48 = vld [vmem:[%s2] sm:$0xf]
    %v49 = vld [vmem:[%s2 + $0x4] sm:$0xf]
    %v50 = vld [vmem:[%s2 + $0x8] sm:$0xf]
    %v51 = vld [vmem:[%s2 + $0xc] sm:$0xf]
    %v52 = vld [vmem:[%s2 + $0x10] sm:$0xf]
    %v53 = vld [vmem:[%s2 + $0x14] sm:$0xf]
    %v54 = vld [vmem:[%s2 + $0x18] sm:$0xf]
    %v55 = vld [vmem:[%s2 + $0x1c] sm:$0xf]
    %v56 = vld [vmem:[%s2 + $0x20] sm:$0xf]
    %v57 = vld [vmem:[%s2 + $0x24] sm:$0xf]
    %v58 = vld [vmem:[%s2 + $0x28] sm:$0xf]
    %v59 = vld [vmem:[%s2 + $0x2c] sm:$0xf]
    %v60 = vld [vmem:[%s2 + $0x30] sm:$0xf]
    %v61 = vld [vmem:[%s2 + $0x34] sm:$0xf]
    %v62 = vld [vmem:[%s2 + $0x38] sm:$0xf]
    %v63 = vld [vmem:[%s2 + $0x3c] sm:$0xf]
    %v64 = vld [vmem:[%s2 + $0x40] sm:$0xf]
    %v65 = vld [vmem:[%s2 + $0x44] sm:$0xf]
    %v66 = vld [vmem:[%s2 + $0x48] sm:$0xf]
    %v67 = vld [vmem:[%s2 + $0x4c] sm:$0xf]
    %v68 = vld [vmem:[%s2 + $0x50] sm:$0xf]
    %v69 = vld [vmem:[%s2 + $0x54] sm:$0xf]
    %v70 = vld [vmem:[%s2 + $0x58] sm:$0xf]
    %v71 = vld [vmem:[%s2 + $0x5c] sm:$0xf]
    %v72 = vld [vmem:[%s2 + $0x60] sm:$0xf]
    %v73 = vld [vmem:[%s2 + $0x64] sm:$0xf]
    %v74 = vld [vmem:[%s2 + $0x68] sm:$0xf]
    %v75 = vld [vmem:[%s2 + $0x6c] sm:$0xf]
    %v76 = vld [vmem:[%s2 + $0x70] sm:$0xf]
    %v77 = vld [vmem:[%s2 + $0x74] sm:$0xf]
    %v78 = vld [vmem:[%s2 + $0x78] sm:$0xf]
    %v79 = vld [vmem:[%s2 + $0x7c] sm:$0xf]
    %v80 = vld [vmem:[%s3] sm:$0xf]
    %v81 = vld [vmem:[%s3 + $0x4] sm:$0xf]
    %v82 = vld [vmem:[%s3 + $0x8] sm:$0xf]
    %v83 = vld [vmem:[%s3 + $0xc] sm:$0xf]
    %v84 = vld [vmem:[%s3 + $0x10] sm:$0xf]
    %v85 = vld [vmem:[%s3 + $0x14] sm:$0xf]
    %v86 = vld [vmem:[%s3 + $0x18] sm:$0xf]
    %v87 = vld [vmem:[%s3 + $0x1c] sm:$0xf]
    %v88 = vld [vmem:[%s3 + $0x20] sm:$0xf]
    %v89 = vld [vmem:[%s3 + $0x24] sm:$0xf]
    %v90 = vld [vmem:[%s3 + $0x28] sm:$0xf]
    %v91 = vld [vmem:[%s3 + $0x2c] sm:$0xf]
    %v92 = vld [vmem:[%s3 + $0x30] sm:$0xf]
    %v93 = vld [vmem:[%s3 + $0x34] sm:$0xf]
    %v94 = vld [vmem:[%s3 + $0x38] sm:$0xf]
    %v95 = vld [vmem:[%s3 + $0x3c] sm:$0xf]
    %v96 = vld [vmem:[%s3 + $0x40] sm:$0xf]
    %v97 = vld [vmem:[%s3 + $0x44] sm:$0xf]
    %v98 = vld [vmem:[%s3 + $0x48] sm:$0xf]
    %v99 = vld [vmem:[%s3 + $0x4c] sm:$0xf]
    %v100 = vld [vmem:[%s3 + $0x50] sm:$0xf]
    %v101 = vld [vmem:[%s3 + $0x54] sm:$0xf]
    %v102 = vld [vmem:[%s3 + $0x58] sm:$0xf]
    %v103 = vld [vmem:[%s3 + $0x5c] sm:$0xf]
    %v104 = vld [vmem:[%s3 + $0x60] sm:$0xf]
    %v105 = vld [vmem:[%s3 + $0x64] sm:$0xf]
    %v106 = vld [vmem:[%s3 + $0x68] sm:$0xf]
    %v107 = vld [vmem:[%s3 + $0x6c] sm:$0xf]
    %v108 = vld [vmem:[%s3 + $0x70] sm:$0xf]
    %v109 = vld [vmem:[%s3 + $0x74] sm:$0xf]
    %v110 = vld [vmem:[%s3 + $0x78] sm:$0xf]
    %v111 = vld [vmem:[%s3 + $0x7c] sm:$0xf]
    %v144 = vunpack.c.l.b16 %v80
    %v145 = vunpack.c.l.b16 %v81
    %v146 = vunpack.c.l.b16 %v82
    %v147 = vunpack.c.l.b16 %v83
    %v148 = vunpack.c.l.b16 %v84
    %v149 = vunpack.c.l.b16 %v85
    %v150 = vunpack.c.l.b16 %v86
    %v151 = vunpack.c.l.b16 %v87
    %v152 = vunpack.c.l.b16 %v88
    %v153 = vunpack.c.l.b16 %v89
    %v154 = vunpack.c.l.b16 %v90
    %v155 = vunpack.c.l.b16 %v91
    %v156 = vunpack.c.l.b16 %v92
    %v157 = vunpack.c.l.b16 %v93
    %v158 = vunpack.c.l.b16 %v94
    %v159 = vunpack.c.l.b16 %v95
    %v160 = vunpack.c.l.b16 %v96
    %v161 = vunpack.c.l.b16 %v97
    %v162 = vunpack.c.l.b16 %v98
    %v163 = vunpack.c.l.b16 %v99
    %v164 = vunpack.c.l.b16 %v100
    %v165 = vunpack.c.l.b16 %v101
    %v166 = vunpack.c.l.b16 %v102
    %v167 = vunpack.c.l.b16 %v103
    %v168 = vunpack.c.l.b16 %v104
    %v169 = vunpack.c.l.b16 %v105
    %v170 = vunpack.c.l.b16 %v106
    %v171 = vunpack.c.l.b16 %v107
    %v172 = vunpack.c.l.b16 %v108
    %v173 = vunpack.c.l.b16 %v109
    %v174 = vunpack.c.l.b16 %v110
    %v175 = vunpack.c.l.b16 %v111
    %v176 = vpack.c.b16 %v145, %v144
    %v177 = vpack.c.b16 %v147, %v146
    %v178 = vpack.c.b16 %v149, %v148
    %v179 = vpack.c.b16 %v151, %v150
    %v180 = vpack.c.b16 %v153, %v152
    %v181 = vpack.c.b16 %v155, %v154
    %v182 = vpack.c.b16 %v157, %v156
    %v183 = vpack.c.b16 %v159, %v158
    %v184 = vpack.c.b16 %v161, %v160
    %v185 = vpack.c.b16 %v163, %v162
    %v186 = vpack.c.b16 %v165, %v164
    %v187 = vpack.c.b16 %v167, %v166
    %v188 = vpack.c.b16 %v169, %v168
    %v189 = vpack.c.b16 %v171, %v170
    %v190 = vpack.c.b16 %v173, %v172
    %v191 = vpack.c.b16 %v175, %v174
    %vm192 = vcmask 48128
    %v194 = vsel %vm192, %v176, 0
    %v197 = vsel %vm192, %v177, 0
    %v200 = vsel %vm192, %v178, 0
    %v203 = vsel %vm192, %v179, 0
    %v206 = vsel %vm192, %v180, 0
    %v209 = vsel %vm192, %v181, 0
    %v212 = vsel %vm192, %v182, 0
    %v215 = vsel %vm192, %v183, 0
    %v218 = vsel %vm192, %v184, 0
    %v221 = vsel %vm192, %v185, 0
    %v224 = vsel %vm192, %v186, 0
    %v227 = vsel %vm192, %v187, 0
    %v230 = vsel %vm192, %v188, 0
    %v233 = vsel %vm192, %v189, 0
    %v236 = vsel %vm192, %v190, 0
    %v239 = vsel %vm192, %v191, 0
    %vm241 = vcmask 1042432
    %v243 = vsel %vm241, %v47, 0
    %245 = vmatprep.subr.bf16.mxu0 0
    %246 = vmatpush1.bf16.msra.mxu0 %v243
    %247 = vmatprep.subr.bf16.mxu0 0
    %248 = vmatpush1.bf16.msra.mxu0 0
    %249 = vmatprep.subr.bf16.mxu0 0
    %250 = vmatpush1.bf16.msra.mxu0 0
    %251 = vmatprep.subr.bf16.mxu0 0
    %252 = vmatpush1.bf16.msra.mxu0 0
    %253 = vmatprep.subr.bf16.mxu0 0
    %254 = vmatpush1.bf16.msra.mxu0 0
    %255 = vmatprep.subr.bf16.mxu0 0
    %256 = vmatpush1.bf16.msra.mxu0 0
    %257 = vmatprep.subr.bf16.mxu0 0
    %258 = vmatpush1.bf16.msra.mxu0 0
    %259 = vmatprep.subr.bf16.mxu0 0
    %260 = vmatpush1.bf16.msra.mxu0 0
    %261 = vmatprep.subr.bf16.mxu0 0
    %262 = vmatpush1.bf16.msra.mxu0 0
    %263 = vmatprep.subr.bf16.mxu0 0
    %264 = vmatpush1.bf16.msra.mxu0 0
    %265 = vmatprep.subr.bf16.mxu0 0
    %266 = vmatpush1.bf16.msra.mxu0 0
    %267 = vmatprep.subr.bf16.mxu0 0
    %268 = vmatpush1.bf16.msra.mxu0 0
    %269 = vmatprep.subr.bf16.mxu0 0
    %270 = vmatpush1.bf16.msra.mxu0 0
    %271 = vmatprep.subr.bf16.mxu0 0
    %272 = vmatpush1.bf16.msra.mxu0 0
    %273 = vmatprep.subr.bf16.mxu0 0
    %274 = vmatpush1.bf16.msra.mxu0 0
    %275 = vmatprep.subr.bf16.mxu0 0
    %276 = vmatpush1.bf16.msra.mxu0 0
    %277 = vmatprep.mubr.bf16.mxu0 0
    %278 = vmatmul.mubr.bf16.gmra.mrb[0].mxu0 %v194
    %v279 = vpop.f32.mrb[0].mxu0
    %v280 = vadd.f32 0.0, %v279
    %v281 = vpop.f32.mrb[0].mxu0
    %v282 = vpop.f32.mrb[0].mxu0
    %v283 = vadd.f32 0.0, %v282
    %v284 = vpop.f32.mrb[0].mxu0
    %285 = vmatprep.mubr.bf16.mxu0 0
    %286 = vmatmul.mubr.bf16.gmra.mrb[0].mxu0 %v197
    %v287 = vpop.f32.mrb[0].mxu0
    %v288 = vadd.f32 0.0, %v287
    %v289 = vpop.f32.mrb[0].mxu0
    %v290 = vpop.f32.mrb[0].mxu0
    %v291 = vadd.f32 0.0, %v290
    %v292 = vpop.f32.mrb[0].mxu0
    %293 = vmatprep.mubr.bf16.mxu0 0
    %294 = vmatmul.mubr.bf16.gmra.mrb[0].mxu0 %v200
    %v295 = vpop.f32.mrb[0].mxu0
    %v296 = vadd.f32 0.0, %v295
    %v297 = vpop.f32.mrb[0].mxu0
    %v298 = vpop.f32.mrb[0].mxu0
    %v299 = vadd.f32 0.0, %v298
    %v300 = vpop.f32.mrb[0].mxu0
    %301 = vmatprep.mubr.bf16.mxu0 0
    %302 = vmatmul.mubr.bf16.gmra.mrb[0].mxu0 %v203
    %v303 = vpop.f32.mrb[0].mxu0
    %v304 = vadd.f32 0.0, %v303
    %v305 = vpop.f32.mrb[0].mxu0
    %v306 = vpop.f32.mrb[0].mxu0
    %v307 = vadd.f32 0.0, %v306
    %v308 = vpop.f32.mrb[0].mxu0
    %309 = vmatprep.mubr.bf16.mxu0 0
    %310 = vmatmul.mubr.bf16.gmra.mrb[0].mxu0 %v206
    %v311 = vpop.f32.mrb[0].mxu0
    %v312 = vadd.f32 0.0, %v311
    %v313 = vpop.f32.mrb[0].mxu0
    %v314 = vpop.f32.mrb[0].mxu0
    %v315 = vadd.f32 0.0, %v314
    %v316 = vpop.f32.mrb[0].mxu0
    %317 = vmatprep.mubr.bf16.mxu0 0
    %318 = vmatmul.mubr.bf16.gmra.mrb[0].mxu0 %v209
    %v319 = vpop.f32.mrb[0].mxu0
    %v320 = vadd.f32 0.0, %v319
    %v321 = vpop.f32.mrb[0].mxu0
    %v322 = vpop.f32.mrb[0].mxu0
    %v323 = vadd.f32 0.0, %v322
    %v324 = vpop.f32.mrb[0].mxu0
    %325 = vmatprep.mubr.bf16.mxu0 0
    %326 = vmatmul.mubr.bf16.gmra.mrb[0].mxu0 %v212
    %v327 = vpop.f32.mrb[0].mxu0
    %v328 = vadd.f32 0.0, %v327
    %v329 = vpop.f32.mrb[0].mxu0
    %v330 = vpop.f32.mrb[0].mxu0
    %v331 = vadd.f32 0.0, %v330
    %v332 = vpop.f32.mrb[0].mxu0
    %333 = vmatprep.mubr.bf16.mxu0 0
    %334 = vmatmul.mubr.bf16.gmra.mrb[0].mxu0 %v215
    %v335 = vpop.f32.mrb[0].mxu0
    %v336 = vadd.f32 0.0, %v335
    %v337 = vpop.f32.mrb[0].mxu0
    %v338 = vpop.f32.mrb[0].mxu0
    %v339 = vadd.f32 0.0, %v338
    %v340 = vpop.f32.mrb[0].mxu0
    %341 = vmatprep.mubr.bf16.mxu0 0
    %342 = vmatmul.mubr.bf16.gmra.mrb[0].mxu0 %v218
    %v343 = vpop.f32.mrb[0].mxu0
    %v344 = vadd.f32 0.0, %v343
    %v345 = vpop.f32.mrb[0].mxu0
    %v346 = vpop.f32.mrb[0].mxu0
    %v347 = vadd.f32 0.0, %v346
    %v348 = vpop.f32.mrb[0].mxu0
    %349 = vmatprep.mubr.bf16.mxu0 0
    %350 = vmatmul.mubr.bf16.gmra.mrb[0].mxu0 %v221
    %v351 = vpop.f32.mrb[0].mxu0
    %v352 = vadd.f32 0.0, %v351
    %v353 = vpop.f32.mrb[0].mxu0
    %v354 = vpop.f32.mrb[0].mxu0
    %v355 = vadd.f32 0.0, %v354
    %v356 = vpop.f32.mrb[0].mxu0
    %357 = vmatprep.mubr.bf16.mxu0 0
    %358 = vmatmul.mubr.bf16.gmra.mrb[0].mxu0 %v224
    %v359 = vpop.f32.mrb[0].mxu0
    %v360 = vadd.f32 0.0, %v359
    %v361 = vpop.f32.mrb[0].mxu0
    %v362 = vpop.f32.mrb[0].mxu0
    %v363 = vadd.f32 0.0, %v362
    %v364 = vpop.f32.mrb[0].mxu0
    %365 = vmatprep.mubr.bf16.mxu0 0
    %366 = vmatmul.mubr.bf16.gmra.mrb[0].mxu0 %v227
    %v367 = vpop.f32.mrb[0].mxu0
    %v368 = vadd.f32 0.0, %v367
    %v369 = vpop.f32.mrb[0].mxu0
    %v370 = vpop.f32.mrb[0].mxu0
    %v371 = vadd.f32 0.0, %v370
    %v372 = vpop.f32.mrb[0].mxu0
    %373 = vmatprep.mubr.bf16.mxu0 0
    %374 = vmatmul.mubr.bf16.gmra.mrb[0].mxu0 %v230
    %v375 = vpop.f32.mrb[0].mxu0
    %v376 = vadd.f32 0.0, %v375
    %v377 = vpop.f32.mrb[0].mxu0
    %v378 = vpop.f32.mrb[0].mxu0
    %v379 = vadd.f32 0.0, %v378
    %v380 = vpop.f32.mrb[0].mxu0
    %381 = vmatprep.mubr.bf16.mxu0 0
    %382 = vmatmul.mubr.bf16.gmra.mrb[0].mxu0 %v233
    %v383 = vpop.f32.mrb[0].mxu0
    %v384 = vadd.f32 0.0, %v383
    %v385 = vpop.f32.mrb[0].mxu0
    %v386 = vpop.f32.mrb[0].mxu0
    %v387 = vadd.f32 0.0, %v386
    %v388 = vpop.f32.mrb[0].mxu0
    %389 = vmatprep.mubr.bf16.mxu0 0
    %390 = vmatmul.mubr.bf16.gmra.mrb[0].mxu0 %v236
    %v391 = vpop.f32.mrb[0].mxu0
    %v392 = vadd.f32 0.0, %v391
    %v393 = vpop.f32.mrb[0].mxu0
    %v394 = vpop.f32.mrb[0].mxu0
    %v395 = vadd.f32 0.0, %v394
    %v396 = vpop.f32.mrb[0].mxu0
    %397 = vmatprep.mubr.bf16.mxu0 0
    %398 = vmatmul.mubr.bf16.gmra.mrb[0].mxu0 %v239
    %v399 = vpop.f32.mrb[0].mxu0
    %v400 = vadd.f32 0.0, %v399
    %v401 = vpop.f32.mrb[0].mxu0
    %v402 = vpop.f32.mrb[0].mxu0
    %v403 = vadd.f32 0.0, %v402
    %v404 = vpop.f32.mrb[0].mxu0
    %405 = vdwg.mxu0
    %v438 = vunpack.c.l.b16 %v48
    %v439 = vunpack.c.l.b16 %v49
    %v440 = vunpack.c.l.b16 %v50
    %v441 = vunpack.c.l.b16 %v51
    %v442 = vunpack.c.l.b16 %v52
    %v443 = vunpack.c.l.b16 %v53
    %v444 = vunpack.c.l.b16 %v54
    %v445 = vunpack.c.l.b16 %v55
    %v446 = vunpack.c.l.b16 %v56
    %v447 = vunpack.c.l.b16 %v57
    %v448 = vunpack.c.l.b16 %v58
    %v449 = vunpack.c.l.b16 %v59
    %v450 = vunpack.c.l.b16 %v60
    %v451 = vunpack.c.l.b16 %v61
    %v452 = vunpack.c.l.b16 %v62
    %v453 = vunpack.c.l.b16 %v63
    %v454 = vunpack.c.l.b16 %v64
    %v455 = vunpack.c.l.b16 %v65
    %v456 = vunpack.c.l.b16 %v66
    %v457 = vunpack.c.l.b16 %v67
    %v458 = vunpack.c.l.b16 %v68
    %v459 = vunpack.c.l.b16 %v69
    %v460 = vunpack.c.l.b16 %v70
    %v461 = vunpack.c.l.b16 %v71
    %v462 = vunpack.c.l.b16 %v72
    %v463 = vunpack.c.l.b16 %v73
    %v464 = vunpack.c.l.b16 %v74
    %v465 = vunpack.c.l.b16 %v75
    %v466 = vunpack.c.l.b16 %v76
    %v467 = vunpack.c.l.b16 %v77
    %v468 = vunpack.c.l.b16 %v78
    %v469 = vunpack.c.l.b16 %v79
    %v470 = vpack.c.b16 %v439, %v438
    %v471 = vpack.c.b16 %v441, %v440
    %v472 = vpack.c.b16 %v443, %v442
    %v473 = vpack.c.b16 %v445, %v444
    %v474 = vpack.c.b16 %v447, %v446
    %v475 = vpack.c.b16 %v449, %v448
    %v476 = vpack.c.b16 %v451, %v450
    %v477 = vpack.c.b16 %v453, %v452
    %v478 = vpack.c.b16 %v455, %v454
    %v479 = vpack.c.b16 %v457, %v456
    %v480 = vpack.c.b16 %v459, %v458
    %v481 = vpack.c.b16 %v461, %v460
    %v482 = vpack.c.b16 %v463, %v462
    %v483 = vpack.c.b16 %v465, %v464
    %v484 = vpack.c.b16 %v467, %v466
    %v485 = vpack.c.b16 %v469, %v468
    %v488 = vunpack.c.l.b16 %v36
    %v489 = vunpack.c.l.b16 %v37
    %v490 = vpack.c.b16 %v489, %v488
    %vm492 = vcmask 130048
    %v494 = vsel %vm492, %v470, 0
    %v497 = vsel %vm492, %v471, 0
    %v500 = vsel %vm492, %v472, 0
    %v503 = vsel %vm492, %v473, 0
    %v506 = vsel %vm492, %v474, 0
    %v509 = vsel %vm492, %v475, 0
    %v512 = vsel %vm492, %v476, 0
    %v515 = vsel %vm492, %v477, 0
    %v518 = vsel %vm492, %v478, 0
    %v521 = vsel %vm492, %v479, 0
    %v524 = vsel %vm492, %v480, 0
    %v527 = vsel %vm492, %v481, 0
    %v530 = vsel %vm492, %v482, 0
    %v533 = vsel %vm492, %v483, 0
    %v536 = vsel %vm492, %v484, 0
    %v539 = vsel %vm492, %v485, 0
    %541 = vmatprep.subr.bf16.mxu0 0
    %542 = vmatpush1.bf16.msra.mxu0 %v490
    %543 = vmatprep.subr.bf16.mxu0 0
    %544 = vmatpush1.bf16.msra.mxu0 0
    %545 = vmatprep.subr.bf16.mxu0 0
    %546 = vmatpush1.bf16.msra.mxu0 0
    %547 = vmatprep.subr.bf16.mxu0 0
    %548 = vmatpush1.bf16.msra.mxu0 0
    %549 = vmatprep.subr.bf16.mxu0 0
    %550 = vmatpush1.bf16.msra.mxu0 0
    %551 = vmatprep.subr.bf16.mxu0 0
    %552 = vmatpush1.bf16.msra.mxu0 0
    %553 = vmatprep.subr.bf16.mxu0 0
    %554 = vmatpush1.bf16.msra.mxu0 0
    %555 = vmatprep.subr.bf16.mxu0 0
    %556 = vmatpush1.bf16.msra.mxu0 0
    %557 = vmatprep.subr.bf16.mxu0 0
    %558 = vmatpush1.bf16.msra.mxu0 0
    %559 = vmatprep.subr.bf16.mxu0 0
    %560 = vmatpush1.bf16.msra.mxu0 0
    %561 = vmatprep.subr.bf16.mxu0 0
    %562 = vmatpush1.bf16.msra.mxu0 0
    %563 = vmatprep.subr.bf16.mxu0 0
    %564 = vmatpush1.bf16.msra.mxu0 0
    %565 = vmatprep.subr.bf16.mxu0 0
    %566 = vmatpush1.bf16.msra.mxu0 0
    %567 = vmatprep.subr.bf16.mxu0 0
    %568 = vmatpush1.bf16.msra.mxu0 0
    %569 = vmatprep.subr.bf16.mxu0 0
    %570 = vmatpush1.bf16.msra.mxu0 0
    %571 = vmatprep.subr.bf16.mxu0 0
    %572 = vmatpush1.bf16.msra.mxu0 0
    %573 = vmatprep.mubr.bf16.mxu0 0
    %574 = vmatmul.mubr.bf16.gmra.mrb[0].mxu0 %v494
    %v575 = vpop.f32.mrb[0].mxu0
    %v576 = vadd.f32 %v280, %v575
    %v577 = vpop.f32.mrb[0].mxu0
    %v578 = vpop.f32.mrb[0].mxu0
    %v579 = vadd.f32 %v283, %v578
    %v580 = vpop.f32.mrb[0].mxu0
    %581 = vmatprep.mubr.bf16.mxu0 0
    %582 = vmatmul.mubr.bf16.gmra.mrb[0].mxu0 %v497
    %v583 = vpop.f32.mrb[0].mxu0
    %v584 = vadd.f32 %v288, %v583
    %v585 = vpop.f32.mrb[0].mxu0
    %v586 = vpop.f32.mrb[0].mxu0
    %v587 = vadd.f32 %v291, %v586
    %v588 = vpop.f32.mrb[0].mxu0
    %589 = vmatprep.mubr.bf16.mxu0 0
    %590 = vmatmul.mubr.bf16.gmra.mrb[0].mxu0 %v500
    %v591 = vpop.f32.mrb[0].mxu0
    %v592 = vadd.f32 %v296, %v591
    %v593 = vpop.f32.mrb[0].mxu0
    %v594 = vpop.f32.mrb[0].mxu0
    %v595 = vadd.f32 %v299, %v594
    %v596 = vpop.f32.mrb[0].mxu0
    %597 = vmatprep.mubr.bf16.mxu0 0
    %598 = vmatmul.mubr.bf16.gmra.mrb[0].mxu0 %v503
    %v599 = vpop.f32.mrb[0].mxu0
    %v600 = vadd.f32 %v304, %v599
    %v601 = vpop.f32.mrb[0].mxu0
    %v602 = vpop.f32.mrb[0].mxu0
    %v603 = vadd.f32 %v307, %v602
    %v604 = vpop.f32.mrb[0].mxu0
    %605 = vmatprep.mubr.bf16.mxu0 0
    %606 = vmatmul.mubr.bf16.gmra.mrb[0].mxu0 %v506
    %v607 = vpop.f32.mrb[0].mxu0
    %v608 = vadd.f32 %v312, %v607
    %v609 = vpop.f32.mrb[0].mxu0
    %v610 = vpop.f32.mrb[0].mxu0
    %v611 = vadd.f32 %v315, %v610
    %v612 = vpop.f32.mrb[0].mxu0
    %613 = vmatprep.mubr.bf16.mxu0 0
    %614 = vmatmul.mubr.bf16.gmra.mrb[0].mxu0 %v509
    %v615 = vpop.f32.mrb[0].mxu0
    %v616 = vadd.f32 %v320, %v615
    %v617 = vpop.f32.mrb[0].mxu0
    %v618 = vpop.f32.mrb[0].mxu0
    %v619 = vadd.f32 %v323, %v618
    %v620 = vpop.f32.mrb[0].mxu0
    %621 = vmatprep.mubr.bf16.mxu0 0
    %622 = vmatmul.mubr.bf16.gmra.mrb[0].mxu0 %v512
    %v623 = vpop.f32.mrb[0].mxu0
    %v624 = vadd.f32 %v328, %v623
    %v625 = vpop.f32.mrb[0].mxu0
    %v626 = vpop.f32.mrb[0].mxu0
    %v627 = vadd.f32 %v331, %v626
    %v628 = vpop.f32.mrb[0].mxu0
    %629 = vmatprep.mubr.bf16.mxu0 0
    %630 = vmatmul.mubr.bf16.gmra.mrb[0].mxu0 %v515
    %v631 = vpop.f32.mrb[0].mxu0
    %v632 = vadd.f32 %v336, %v631
    %v633 = vpop.f32.mrb[0].mxu0
    %v634 = vpop.f32.mrb[0].mxu0
    %v635 = vadd.f32 %v339, %v634
    %v636 = vpop.f32.mrb[0].mxu0
    %637 = vmatprep.mubr.bf16.mxu0 0
    %638 = vmatmul.mubr.bf16.gmra.mrb[0].mxu0 %v518
    %v639 = vpop.f32.mrb[0].mxu0
    %v640 = vadd.f32 %v344, %v639
    %v641 = vpop.f32.mrb[0].mxu0
    %v642 = vpop.f32.mrb[0].mxu0
    %v643 = vadd.f32 %v347, %v642
    %v644 = vpop.f32.mrb[0].mxu0
    %645 = vmatprep.mubr.bf16.mxu0 0
    %646 = vmatmul.mubr.bf16.gmra.mrb[0].mxu0 %v521
    %v647 = vpop.f32.mrb[0].mxu0
    %v648 = vadd.f32 %v352, %v647
    %v649 = vpop.f32.mrb[0].mxu0
    %v650 = vpop.f32.mrb[0].mxu0
    %v651 = vadd.f32 %v355, %v650
    %v652 = vpop.f32.mrb[0].mxu0
    %653 = vmatprep.mubr.bf16.mxu0 0
    %654 = vmatmul.mubr.bf16.gmra.mrb[0].mxu0 %v524
    %v655 = vpop.f32.mrb[0].mxu0
    %v656 = vadd.f32 %v360, %v655
    %v657 = vpop.f32.mrb[0].mxu0
    %v658 = vpop.f32.mrb[0].mxu0
    %v659 = vadd.f32 %v363, %v658
    %v660 = vpop.f32.mrb[0].mxu0
    %661 = vmatprep.mubr.bf16.mxu0 0
    %662 = vmatmul.mubr.bf16.gmra.mrb[0].mxu0 %v527
    %v663 = vpop.f32.mrb[0].mxu0
    %v664 = vadd.f32 %v368, %v663
    %v665 = vpop.f32.mrb[0].mxu0
    %v666 = vpop.f32.mrb[0].mxu0
    %v667 = vadd.f32 %v371, %v666
    %v668 = vpop.f32.mrb[0].mxu0
    %669 = vmatprep.mubr.bf16.mxu0 0
    %670 = vmatmul.mubr.bf16.gmra.mrb[0].mxu0 %v530
    %v671 = vpop.f32.mrb[0].mxu0
    %v672 = vadd.f32 %v376, %v671
    %v673 = vpop.f32.mrb[0].mxu0
    %v674 = vpop.f32.mrb[0].mxu0
    %v675 = vadd.f32 %v379, %v674
    %v676 = vpop.f32.mrb[0].mxu0
    %677 = vmatprep.mubr.bf16.mxu0 0
    %678 = vmatmul.mubr.bf16.gmra.mrb[0].mxu0 %v533
    %v679 = vpop.f32.mrb[0].mxu0
    %v680 = vadd.f32 %v384, %v679
    %v681 = vpop.f32.mrb[0].mxu0
    %v682 = vpop.f32.mrb[0].mxu0
    %v683 = vadd.f32 %v387, %v682
    %v684 = vpop.f32.mrb[0].mxu0
    %685 = vmatprep.mubr.bf16.mxu0 0
    %686 = vmatmul.mubr.bf16.gmra.mrb[0].mxu0 %v536
    %v687 = vpop.f32.mrb[0].mxu0
    %v688 = vadd.f32 %v392, %v687
    %v689 = vpop.f32.mrb[0].mxu0
    %v690 = vpop.f32.mrb[0].mxu0
    %v691 = vadd.f32 %v395, %v690
    %v692 = vpop.f32.mrb[0].mxu0
    %693 = vmatprep.mubr.bf16.mxu0 0
    %694 = vmatmul.mubr.bf16.gmra.mrb[0].mxu0 %v539
    %v695 = vpop.f32.mrb[0].mxu0
    %v696 = vadd.f32 %v400, %v695
    %v697 = vpop.f32.mrb[0].mxu0
    %v698 = vpop.f32.mrb[0].mxu0
    %v699 = vadd.f32 %v403, %v698
    %v700 = vpop.f32.mrb[0].mxu0
    %701 = vdwg.mxu0
    %v702 = vld [vmem:[%s4] sm:$0xff]
    %v703 = vld [vmem:[%s4 + $0x8] sm:$0xff]
    %v704 = vld [vmem:[%s4 + $0x10] sm:$0xff]
    %v705 = vld [vmem:[%s4 + $0x18] sm:$0xff]
    %v706 = vld [vmem:[%s4 + $0x20] sm:$0xff]
    %v707 = vld [vmem:[%s4 + $0x28] sm:$0xff]
    %v708 = vld [vmem:[%s4 + $0x30] sm:$0xff]
    %v709 = vld [vmem:[%s4 + $0x38] sm:$0xff]
    %v710 = vld [vmem:[%s4 + $0x40] sm:$0xff]
    %v711 = vld [vmem:[%s4 + $0x48] sm:$0xff]
    %v712 = vld [vmem:[%s4 + $0x50] sm:$0xff]
    %v713 = vld [vmem:[%s4 + $0x58] sm:$0xff]
    %v714 = vld [vmem:[%s4 + $0x60] sm:$0xff]
    %v715 = vld [vmem:[%s4 + $0x68] sm:$0xff]
    %v716 = vld [vmem:[%s4 + $0x70] sm:$0xff]
    %v717 = vld [vmem:[%s4 + $0x78] sm:$0xff]
    %v718 = vld [vmem:[%s4 + $0x80] sm:$0xff]
    %v719 = vld [vmem:[%s4 + $0x88] sm:$0xff]
    %v720 = vld [vmem:[%s4 + $0x90] sm:$0xff]
    %v721 = vld [vmem:[%s4 + $0x98] sm:$0xff]
    %v722 = vld [vmem:[%s4 + $0xa0] sm:$0xff]
    %v723 = vld [vmem:[%s4 + $0xa8] sm:$0xff]
    %v724 = vld [vmem:[%s4 + $0xb0] sm:$0xff]
    %v725 = vld [vmem:[%s4 + $0xb8] sm:$0xff]
    %v726 = vld [vmem:[%s4 + $0xc0] sm:$0xff]
    %v727 = vld [vmem:[%s4 + $0xc8] sm:$0xff]
    %v728 = vld [vmem:[%s4 + $0xd0] sm:$0xff]
    %v729 = vld [vmem:[%s4 + $0xd8] sm:$0xff]
    %v730 = vld [vmem:[%s4 + $0xe0] sm:$0xff]
    %v731 = vld [vmem:[%s4 + $0xe8] sm:$0xff]
    %v732 = vld [vmem:[%s4 + $0xf0] sm:$0xff]
    %v733 = vld [vmem:[%s4 + $0xf8] sm:$0xff]
    %735 = vset.pattern.permute.xlu0 0
    %736 = vperm.xlu0 %735, %v702
    %v737 = vpop.permute.xlu0 %736
    %740 = vset.pattern.permute.xlu0 0
    %741 = vperm.xlu0 %740, %v703
    %v742 = vpop.permute.xlu0 %741
    %745 = vset.pattern.permute.xlu0 0
    %746 = vperm.xlu0 %745, %v704
    %v747 = vpop.permute.xlu0 %746
    %750 = vset.pattern.permute.xlu0 0
    %751 = vperm.xlu0 %750, %v705
    %v752 = vpop.permute.xlu0 %751
    %755 = vset.pattern.permute.xlu0 0
    %756 = vperm.xlu0 %755, %v706
    %v757 = vpop.permute.xlu0 %756
    %760 = vset.pattern.permute.xlu0 0
    %761 = vperm.xlu0 %760, %v707
    %v762 = vpop.permute.xlu0 %761
    %765 = vset.pattern.permute.xlu0 0
    %766 = vperm.xlu0 %765, %v708
    %v767 = vpop.permute.xlu0 %766
    %770 = vset.pattern.permute.xlu0 0
    %771 = vperm.xlu0 %770, %v709
    %v772 = vpop.permute.xlu0 %771
    %775 = vset.pattern.permute.xlu0 0
    %776 = vperm.xlu0 %775, %v710
    %v777 = vpop.permute.xlu0 %776
    %780 = vset.pattern.permute.xlu0 0
    %781 = vperm.xlu0 %780, %v711
    %v782 = vpop.permute.xlu0 %781
    %785 = vset.pattern.permute.xlu0 0
    %786 = vperm.xlu0 %785, %v712
    %v787 = vpop.permute.xlu0 %786
    %790 = vset.pattern.permute.xlu0 0
    %791 = vperm.xlu0 %790, %v713
    %v792 = vpop.permute.xlu0 %791
    %795 = vset.pattern.permute.xlu0 0
    %796 = vperm.xlu0 %795, %v714
    %v797 = vpop.permute.xlu0 %796
    %800 = vset.pattern.permute.xlu0 0
    %801 = vperm.xlu0 %800, %v715
    %v802 = vpop.permute.xlu0 %801
    %805 = vset.pattern.permute.xlu0 0
    %806 = vperm.xlu0 %805, %v716
    %v807 = vpop.permute.xlu0 %806
    %810 = vset.pattern.permute.xlu0 0
    %811 = vperm.xlu0 %810, %v717
    %v812 = vpop.permute.xlu0 %811
    %815 = vset.pattern.permute.xlu0 0
    %816 = vperm.xlu0 %815, %v718
    %v817 = vpop.permute.xlu0 %816
    %820 = vset.pattern.permute.xlu0 0
    %821 = vperm.xlu0 %820, %v719
    %v822 = vpop.permute.xlu0 %821
    %825 = vset.pattern.permute.xlu0 0
    %826 = vperm.xlu0 %825, %v720
    %v827 = vpop.permute.xlu0 %826
    %830 = vset.pattern.permute.xlu0 0
    %831 = vperm.xlu0 %830, %v721
    %v832 = vpop.permute.xlu0 %831
    %835 = vset.pattern.permute.xlu0 0
    %836 = vperm.xlu0 %835, %v722
    %v837 = vpop.permute.xlu0 %836
    %840 = vset.pattern.permute.xlu0 0
    %841 = vperm.xlu0 %840, %v723
    %v842 = vpop.permute.xlu0 %841
    %845 = vset.pattern.permute.xlu0 0
    %846 = vperm.xlu0 %845, %v724
    %v847 = vpop.permute.xlu0 %846
    %850 = vset.pattern.permute.xlu0 0
    %851 = vperm.xlu0 %850, %v725
    %v852 = vpop.permute.xlu0 %851
    %855 = vset.pattern.permute.xlu0 0
    %856 = vperm.xlu0 %855, %v726
    %v857 = vpop.permute.xlu0 %856
    %860 = vset.pattern.permute.xlu0 0
    %861 = vperm.xlu0 %860, %v727
    %v862 = vpop.permute.xlu0 %861
    %865 = vset.pattern.permute.xlu0 0
    %866 = vperm.xlu0 %865, %v728
    %v867 = vpop.permute.xlu0 %866
    %870 = vset.pattern.permute.xlu0 0
    %871 = vperm.xlu0 %870, %v729
    %v872 = vpop.permute.xlu0 %871
    %875 = vset.pattern.permute.xlu0 0
    %876 = vperm.xlu0 %875, %v730
    %v877 = vpop.permute.xlu0 %876
    %880 = vset.pattern.permute.xlu0 0
    %881 = vperm.xlu0 %880, %v731
    %v882 = vpop.permute.xlu0 %881
    %885 = vset.pattern.permute.xlu0 0
    %886 = vperm.xlu0 %885, %v732
    %v887 = vpop.permute.xlu0 %886
    %890 = vset.pattern.permute.xlu0 0
    %891 = vperm.xlu0 %890, %v733
    %v892 = vpop.permute.xlu0 %891
    %v894 = vadd.f32 %v576, %v737
    %v895 = vadd.f32 %v579, %v742
    %v896 = vadd.f32 %v584, %v747
    %v897 = vadd.f32 %v587, %v752
    %v898 = vadd.f32 %v592, %v757
    %v899 = vadd.f32 %v595, %v762
    %v900 = vadd.f32 %v600, %v767
    %v901 = vadd.f32 %v603, %v772
    %v902 = vadd.f32 %v608, %v777
    %v903 = vadd.f32 %v611, %v782
    %v904 = vadd.f32 %v616, %v787
    %v905 = vadd.f32 %v619, %v792
    %v906 = vadd.f32 %v624, %v797
    %v907 = vadd.f32 %v627, %v802
    %v908 = vadd.f32 %v632, %v807
    %v909 = vadd.f32 %v635, %v812
    %v910 = vadd.f32 %v640, %v817
    %v911 = vadd.f32 %v643, %v822
    %v912 = vadd.f32 %v648, %v827
    %v913 = vadd.f32 %v651, %v832
    %v914 = vadd.f32 %v656, %v837
    %v915 = vadd.f32 %v659, %v842
    %v916 = vadd.f32 %v664, %v847
    %v917 = vadd.f32 %v667, %v852
    %v918 = vadd.f32 %v672, %v857
    %v919 = vadd.f32 %v675, %v862
    %v920 = vadd.f32 %v680, %v867
    %v921 = vadd.f32 %v683, %v872
    %v922 = vadd.f32 %v688, %v877
    %v923 = vadd.f32 %v691, %v882
    %v924 = vadd.f32 %v696, %v887
    %v925 = vadd.f32 %v699, %v892
    %v926 = vmax.f32 %v894, 0.0
    %v927 = vmax.f32 %v895, 0.0
    %v928 = vmax.f32 %v896, 0.0
    %v929 = vmax.f32 %v897, 0.0
    %v930 = vmax.f32 %v898, 0.0
    %v931 = vmax.f32 %v899, 0.0
    %v932 = vmax.f32 %v900, 0.0
    %v933 = vmax.f32 %v901, 0.0
    %v934 = vmax.f32 %v902, 0.0
    %v935 = vmax.f32 %v903, 0.0
    %v936 = vmax.f32 %v904, 0.0
    %v937 = vmax.f32 %v905, 0.0
    %v938 = vmax.f32 %v906, 0.0
    %v939 = vmax.f32 %v907, 0.0
    %v940 = vmax.f32 %v908, 0.0
    %v941 = vmax.f32 %v909, 0.0
    %v942 = vmax.f32 %v910, 0.0
    %v943 = vmax.f32 %v911, 0.0
    %v944 = vmax.f32 %v912, 0.0
    %v945 = vmax.f32 %v913, 0.0
    %v946 = vmax.f32 %v914, 0.0
    %v947 = vmax.f32 %v915, 0.0
    %v948 = vmax.f32 %v916, 0.0
    %v949 = vmax.f32 %v917, 0.0
    %v950 = vmax.f32 %v918, 0.0
    %v951 = vmax.f32 %v919, 0.0
    %v952 = vmax.f32 %v920, 0.0
    %v953 = vmax.f32 %v921, 0.0
    %v954 = vmax.f32 %v922, 0.0
    %v955 = vmax.f32 %v923, 0.0
    %v956 = vmax.f32 %v924, 0.0
    %v957 = vmax.f32 %v925, 0.0
    %v958 = vld [vmem:[%s5] sm:$0xff]
    %v959 = vld [vmem:[%s5 + $0x8] sm:$0xff]
    %v960 = vld [vmem:[%s5 + $0x10] sm:$0xff]
    %v961 = vld [vmem:[%s5 + $0x18] sm:$0xff]
    %v962 = vld [vmem:[%s5 + $0x20] sm:$0xff]
    %v963 = vld [vmem:[%s5 + $0x28] sm:$0xff]
    %v964 = vld [vmem:[%s5 + $0x30] sm:$0xff]
    %v965 = vld [vmem:[%s5 + $0x38] sm:$0xff]
    %v966 = vld [vmem:[%s5 + $0x40] sm:$0xff]
    %v967 = vld [vmem:[%s5 + $0x48] sm:$0xff]
    %v968 = vld [vmem:[%s5 + $0x50] sm:$0xff]
    %v969 = vld [vmem:[%s5 + $0x58] sm:$0xff]
    %v970 = vld [vmem:[%s5 + $0x60] sm:$0xff]
    %v971 = vld [vmem:[%s5 + $0x68] sm:$0xff]
    %v972 = vld [vmem:[%s5 + $0x70] sm:$0xff]
    %v973 = vld [vmem:[%s5 + $0x78] sm:$0xff]
    %v974 = vld [vmem:[%s5 + $0x80] sm:$0xff]
    %v975 = vld [vmem:[%s5 + $0x88] sm:$0xff]
    %v976 = vld [vmem:[%s5 + $0x90] sm:$0xff]
    %v977 = vld [vmem:[%s5 + $0x98] sm:$0xff]
    %v978 = vld [vmem:[%s5 + $0xa0] sm:$0xff]
    %v979 = vld [vmem:[%s5 + $0xa8] sm:$0xff]
    %v980 = vld [vmem:[%s5 + $0xb0] sm:$0xff]
    %v981 = vld [vmem:[%s5 + $0xb8] sm:$0xff]
    %v982 = vld [vmem:[%s5 + $0xc0] sm:$0xff]
    %v983 = vld [vmem:[%s5 + $0xc8] sm:$0xff]
    %v984 = vld [vmem:[%s5 + $0xd0] sm:$0xff]
    %v985 = vld [vmem:[%s5 + $0xd8] sm:$0xff]
    %v986 = vld [vmem:[%s5 + $0xe0] sm:$0xff]
    %v987 = vld [vmem:[%s5 + $0xe8] sm:$0xff]
    %v988 = vld [vmem:[%s5 + $0xf0] sm:$0xff]
    %v989 = vld [vmem:[%s5 + $0xf8] sm:$0xff]
    %v990 = vpack.c.bf16 %v927, %v926
    %v991 = vpack.c.bf16 %v929, %v928
    %v992 = vpack.c.bf16 %v931, %v930
    %v993 = vpack.c.bf16 %v933, %v932
    %v994 = vpack.c.bf16 %v935, %v934
    %v995 = vpack.c.bf16 %v937, %v936
    %v996 = vpack.c.bf16 %v939, %v938
    %v997 = vpack.c.bf16 %v941, %v940
    %v998 = vpack.c.bf16 %v943, %v942
    %v999 = vpack.c.bf16 %v945, %v944
    %v1000 = vpack.c.bf16 %v947, %v946
    %v1001 = vpack.c.bf16 %v949, %v948
    %v1002 = vpack.c.bf16 %v951, %v950
    %v1003 = vpack.c.bf16 %v953, %v952
    %v1004 = vpack.c.bf16 %v955, %v954
    %v1005 = vpack.c.bf16 %v957, %v956
    %v1006 = vld [vmem:[%s6] sm:$0xff]
    %v1007 = vld [vmem:[%s6 + $0x8] sm:$0xff]
    %v1008 = vld [vmem:[%s6 + $0x10] sm:$0xff]
    %v1009 = vld [vmem:[%s6 + $0x18] sm:$0xff]
    %v1010 = vld [vmem:[%s6 + $0x20] sm:$0xff]
    %v1011 = vld [vmem:[%s6 + $0x28] sm:$0xff]
    %v1012 = vld [vmem:[%s6 + $0x30] sm:$0xff]
    %v1013 = vld [vmem:[%s6 + $0x38] sm:$0xff]
    %v1014 = vld [vmem:[%s6 + $0x40] sm:$0xff]
    %v1015 = vld [vmem:[%s6 + $0x48] sm:$0xff]
    %v1016 = vld [vmem:[%s6 + $0x50] sm:$0xff]
    %v1017 = vld [vmem:[%s6 + $0x58] sm:$0xff]
    %v1018 = vld [vmem:[%s6 + $0x60] sm:$0xff]
    %v1019 = vld [vmem:[%s6 + $0x68] sm:$0xff]
    %v1020 = vld [vmem:[%s6 + $0x70] sm:$0xff]
    %v1021 = vld [vmem:[%s6 + $0x78] sm:$0xff]
    %v1022 = vld [vmem:[%s6 + $0x80] sm:$0xff]
    %v1023 = vld [vmem:[%s6 + $0x88] sm:$0xff]
    %v1024 = vld [vmem:[%s6 + $0x90] sm:$0xff]
    %v1025 = vld [vmem:[%s6 + $0x98] sm:$0xff]
    %v1026 = vld [vmem:[%s6 + $0xa0] sm:$0xff]
    %v1027 = vld [vmem:[%s6 + $0xa8] sm:$0xff]
    %v1028 = vld [vmem:[%s6 + $0xb0] sm:$0xff]
    %v1029 = vld [vmem:[%s6 + $0xb8] sm:$0xff]
    %v1030 = vld [vmem:[%s6 + $0xc0] sm:$0xff]
    %v1031 = vld [vmem:[%s6 + $0xc8] sm:$0xff]
    %v1032 = vld [vmem:[%s6 + $0xd0] sm:$0xff]
    %v1033 = vld [vmem:[%s6 + $0xd8] sm:$0xff]
    %v1034 = vld [vmem:[%s6 + $0xe0] sm:$0xff]
    %v1035 = vld [vmem:[%s6 + $0xe8] sm:$0xff]
    %v1036 = vld [vmem:[%s6 + $0xf0] sm:$0xff]
    %v1037 = vld [vmem:[%s6 + $0xf8] sm:$0xff]
    %1039 = vset.pattern.permute.xlu0 0
    %1040 = vperm.xlu0 %1039, %v1006
    %v1041 = vpop.permute.xlu0 %1040
    %1044 = vset.pattern.permute.xlu0 0
    %1045 = vperm.xlu0 %1044, %v1007
    %v1046 = vpop.permute.xlu0 %1045
    %1049 = vset.pattern.permute.xlu0 0
    %1050 = vperm.xlu0 %1049, %v1008
    %v1051 = vpop.permute.xlu0 %1050
    %1054 = vset.pattern.permute.xlu0 0
    %1055 = vperm.xlu0 %1054, %v1009
    %v1056 = vpop.permute.xlu0 %1055
    %1059 = vset.pattern.permute.xlu0 0
    %1060 = vperm.xlu0 %1059, %v1010
    %v1061 = vpop.permute.xlu0 %1060
    %1064 = vset.pattern.permute.xlu0 0
    %1065 = vperm.xlu0 %1064, %v1011
    %v1066 = vpop.permute.xlu0 %1065
    %1069 = vset.pattern.permute.xlu0 0
    %1070 = vperm.xlu0 %1069, %v1012
    %v1071 = vpop.permute.xlu0 %1070
    %1074 = vset.pattern.permute.xlu0 0
    %1075 = vperm.xlu0 %1074, %v1013
    %v1076 = vpop.permute.xlu0 %1075
    %1079 = vset.pattern.permute.xlu0 0
    %1080 = vperm.xlu0 %1079, %v1014
    %v1081 = vpop.permute.xlu0 %1080
    %1084 = vset.pattern.permute.xlu0 0
    %1085 = vperm.xlu0 %1084, %v1015
    %v1086 = vpop.permute.xlu0 %1085
    %1089 = vset.pattern.permute.xlu0 0
    %1090 = vperm.xlu0 %1089, %v1016
    %v1091 = vpop.permute.xlu0 %1090
    %1094 = vset.pattern.permute.xlu0 0
    %1095 = vperm.xlu0 %1094, %v1017
    %v1096 = vpop.permute.xlu0 %1095
    %1099 = vset.pattern.permute.xlu0 0
    %1100 = vperm.xlu0 %1099, %v1018
    %v1101 = vpop.permute.xlu0 %1100
    %1104 = vset.pattern.permute.xlu0 0
    %1105 = vperm.xlu0 %1104, %v1019
    %v1106 = vpop.permute.xlu0 %1105
    %1109 = vset.pattern.permute.xlu0 0
    %1110 = vperm.xlu0 %1109, %v1020
    %v1111 = vpop.permute.xlu0 %1110
    %1114 = vset.pattern.permute.xlu0 0
    %1115 = vperm.xlu0 %1114, %v1021
    %v1116 = vpop.permute.xlu0 %1115
    %1119 = vset.pattern.permute.xlu0 0
    %1120 = vperm.xlu0 %1119, %v1022
    %v1121 = vpop.permute.xlu0 %1120
    %1124 = vset.pattern.permute.xlu0 0
    %1125 = vperm.xlu0 %1124, %v1023
    %v1126 = vpop.permute.xlu0 %1125
    %1129 = vset.pattern.permute.xlu0 0
    %1130 = vperm.xlu0 %1129, %v1024
    %v1131 = vpop.permute.xlu0 %1130
    %1134 = vset.pattern.permute.xlu0 0
    %1135 = vperm.xlu0 %1134, %v1025
    %v1136 = vpop.permute.xlu0 %1135
    %1139 = vset.pattern.permute.xlu0 0
    %1140 = vperm.xlu0 %1139, %v1026
    %v1141 = vpop.permute.xlu0 %1140
    %1144 = vset.pattern.permute.xlu0 0
    %1145 = vperm.xlu0 %1144, %v1027
    %v1146 = vpop.permute.xlu0 %1145
    %1149 = vset.pattern.permute.xlu0 0
    %1150 = vperm.xlu0 %1149, %v1028
    %v1151 = vpop.permute.xlu0 %1150
    %1154 = vset.pattern.permute.xlu0 0
    %1155 = vperm.xlu0 %1154, %v1029
    %v1156 = vpop.permute.xlu0 %1155
    %1159 = vset.pattern.permute.xlu0 0
    %1160 = vperm.xlu0 %1159, %v1030
    %v1161 = vpop.permute.xlu0 %1160
    %1164 = vset.pattern.permute.xlu0 0
    %1165 = vperm.xlu0 %1164, %v1031
    %v1166 = vpop.permute.xlu0 %1165
    %1169 = vset.pattern.permute.xlu0 0
    %1170 = vperm.xlu0 %1169, %v1032
    %v1171 = vpop.permute.xlu0 %1170
    %1174 = vset.pattern.permute.xlu0 0
    %1175 = vperm.xlu0 %1174, %v1033
    %v1176 = vpop.permute.xlu0 %1175
    %1179 = vset.pattern.permute.xlu0 0
    %1180 = vperm.xlu0 %1179, %v1034
    %v1181 = vpop.permute.xlu0 %1180
    %1184 = vset.pattern.permute.xlu0 0
    %1185 = vperm.xlu0 %1184, %v1035
    %v1186 = vpop.permute.xlu0 %1185
    %1189 = vset.pattern.permute.xlu0 0
    %1190 = vperm.xlu0 %1189, %v1036
    %v1191 = vpop.permute.xlu0 %1190
    %1194 = vset.pattern.permute.xlu0 0
    %1195 = vperm.xlu0 %1194, %v1037
    %v1196 = vpop.permute.xlu0 %1195
    %v1230 = vunpack.c.l.b16 %v958
    %v1231 = vunpack.c.h.b16 %v958
    %v1232 = vunpack.c.l.b16 %v959
    %v1233 = vunpack.c.h.b16 %v959
    %v1234 = vunpack.c.l.b16 %v960
    %v1235 = vunpack.c.h.b16 %v960
    %v1236 = vunpack.c.l.b16 %v961
    %v1237 = vunpack.c.h.b16 %v961
    %v1238 = vunpack.c.l.b16 %v962
    %v1239 = vunpack.c.h.b16 %v962
    %v1240 = vunpack.c.l.b16 %v963
    %v1241 = vunpack.c.h.b16 %v963
    %v1242 = vunpack.c.l.b16 %v964
    %v1243 = vunpack.c.h.b16 %v964
    %v1244 = vunpack.c.l.b16 %v965
    %v1245 = vunpack.c.h.b16 %v965
    %v1246 = vunpack.c.l.b16 %v966
    %v1247 = vunpack.c.h.b16 %v966
    %v1248 = vunpack.c.l.b16 %v967
    %v1249 = vunpack.c.h.b16 %v967
    %v1250 = vunpack.c.l.b16 %v968
    %v1251 = vunpack.c.h.b16 %v968
    %v1252 = vunpack.c.l.b16 %v969
    %v1253 = vunpack.c.h.b16 %v969
    %v1254 = vunpack.c.l.b16 %v970
    %v1255 = vunpack.c.h.b16 %v970
    %v1256 = vunpack.c.l.b16 %v971
    %v1257 = vunpack.c.h.b16 %v971
    %v1258 = vunpack.c.l.b16 %v972
    %v1259 = vunpack.c.h.b16 %v972
    %v1260 = vunpack.c.l.b16 %v973
    %v1261 = vunpack.c.h.b16 %v973
    %v1262 = vunpack.c.l.b16 %v974
    %v1263 = vunpack.c.h.b16 %v974
    %v1264 = vunpack.c.l.b16 %v975
    %v1265 = vunpack.c.h.b16 %v975
    %v1266 = vunpack.c.l.b16 %v976
    %v1267 = vunpack.c.h.b16 %v976
    %v1268 = vunpack.c.l.b16 %v977
    %v1269 = vunpack.c.h.b16 %v977
    %v1270 = vunpack.c.l.b16 %v978
    %v1271 = vunpack.c.h.b16 %v978
    %v1272 = vunpack.c.l.b16 %v979
    %v1273 = vunpack.c.h.b16 %v979
    %v1274 = vunpack.c.l.b16 %v980
    %v1275 = vunpack.c.h.b16 %v980
    %v1276 = vunpack.c.l.b16 %v981
    %v1277 = vunpack.c.h.b16 %v981
    %v1278 = vunpack.c.l.b16 %v982
    %v1279 = vunpack.c.h.b16 %v982
    %v1280 = vunpack.c.l.b16 %v983
    %v1281 = vunpack.c.h.b16 %v983
    %v1282 = vunpack.c.l.b16 %v984
    %v1283 = vunpack.c.h.b16 %v984
    %v1284 = vunpack.c.l.b16 %v985
    %v1285 = vunpack.c.h.b16 %v985
    %v1286 = vunpack.c.l.b16 %v986
    %v1287 = vunpack.c.h.b16 %v986
    %v1288 = vunpack.c.l.b16 %v987
    %v1289 = vunpack.c.h.b16 %v987
    %v1290 = vunpack.c.l.b16 %v988
    %v1291 = vunpack.c.h.b16 %v988
    %v1292 = vunpack.c.l.b16 %v989
    %v1293 = vunpack.c.h.b16 %v989
    %v1294 = vpack.c.b16 %v1232, %v1230
    %v1295 = vpack.c.b16 %v1233, %v1231
    %v1296 = vpack.c.b16 %v1236, %v1234
    %v1297 = vpack.c.b16 %v1237, %v1235
    %v1298 = vpack.c.b16 %v1240, %v1238
    %v1299 = vpack.c.b16 %v1241, %v1239
    %v1300 = vpack.c.b16 %v1244, %v1242
    %v1301 = vpack.c.b16 %v1245, %v1243
    %v1302 = vpack.c.b16 %v1248, %v1246
    %v1303 = vpack.c.b16 %v1249, %v1247
    %v1304 = vpack.c.b16 %v1252, %v1250
    %v1305 = vpack.c.b16 %v1253, %v1251
    %v1306 = vpack.c.b16 %v1256, %v1254
    %v1307 = vpack.c.b16 %v1257, %v1255
    %v1308 = vpack.c.b16 %v1260, %v1258
    %v1309 = vpack.c.b16 %v1261, %v1259
    %v1310 = vpack.c.b16 %v1264, %v1262
    %v1311 = vpack.c.b16 %v1265, %v1263
    %v1312 = vpack.c.b16 %v1268, %v1266
    %v1313 = vpack.c.b16 %v1269, %v1267
    %v1314 = vpack.c.b16 %v1272, %v1270
    %v1315 = vpack.c.b16 %v1273, %v1271
    %v1316 = vpack.c.b16 %v1276, %v1274
    %v1317 = vpack.c.b16 %v1277, %v1275
    %v1318 = vpack.c.b16 %v1280, %v1278
    %v1319 = vpack.c.b16 %v1281, %v1279
    %v1320 = vpack.c.b16 %v1284, %v1282
    %v1321 = vpack.c.b16 %v1285, %v1283
    %v1322 = vpack.c.b16 %v1288, %v1286
    %v1323 = vpack.c.b16 %v1289, %v1287
    %v1324 = vpack.c.b16 %v1292, %v1290
    %v1325 = vpack.c.b16 %v1293, %v1291
    %1358 = vmatprep.subr.bf16.mxu0 0
    %1359 = vmatpush1.bf16.msra.mxu0 %v990
    %1360 = vmatprep.subr.bf16.mxu0 0
    %1361 = vmatpush1.bf16.msra.mxu0 %v991
    %1362 = vmatprep.subr.bf16.mxu0 0
    %1363 = vmatpush1.bf16.msra.mxu0 %v992
    %1364 = vmatprep.subr.bf16.mxu0 0
    %1365 = vmatpush1.bf16.msra.mxu0 %v993
    %1366 = vmatprep.subr.bf16.mxu0 0
    %1367 = vmatpush1.bf16.msra.mxu0 %v994
    %1368 = vmatprep.subr.bf16.mxu0 0
    %1369 = vmatpush1.bf16.msra.mxu0 %v995
    %1370 = vmatprep.subr.bf16.mxu0 0
    %1371 = vmatpush1.bf16.msra.mxu0 %v996
    %1372 = vmatprep.subr.bf16.mxu0 0
    %1373 = vmatpush1.bf16.msra.mxu0 %v997
    %1374 = vmatprep.subr.bf16.mxu0 0
    %1375 = vmatpush1.bf16.msra.mxu0 %v998
    %1376 = vmatprep.subr.bf16.mxu0 0
    %1377 = vmatpush1.bf16.msra.mxu0 %v999
    %1378 = vmatprep.subr.bf16.mxu0 0
    %1379 = vmatpush1.bf16.msra.mxu0 %v1000
    %1380 = vmatprep.subr.bf16.mxu0 0
    %1381 = vmatpush1.bf16.msra.mxu0 %v1001
    %1382 = vmatprep.subr.bf16.mxu0 0
    %1383 = vmatpush1.bf16.msra.mxu0 %v1002
    %1384 = vmatprep.subr.bf16.mxu0 0
    %1385 = vmatpush1.bf16.msra.mxu0 %v1003
    %1386 = vmatprep.subr.bf16.mxu0 0
    %1387 = vmatpush1.bf16.msra.mxu0 %v1004
    %1388 = vmatprep.subr.bf16.mxu0 0
    %1389 = vmatpush1.bf16.msra.mxu0 %v1005
    %1390 = vmatprep.mubr.bf16.mxu0 %v1295
    %1391 = vmatmul.mubr.bf16.gmra.mrb[0].mxu0 %v1294
    %v1392 = vpop.f32.mrb[0].mxu0
    %v1393 = vadd.f32 %v1041, %v1392
    %v1394 = vpop.f32.mrb[0].mxu0
    %v1395 = vpop.f32.mrb[0].mxu0
    %v1396 = vadd.f32 %v1046, %v1395
    %v1397 = vpop.f32.mrb[0].mxu0
    %1398 = vmatprep.mubr.bf16.mxu0 %v1297
    %1399 = vmatmul.mubr.bf16.gmra.mrb[0].mxu0 %v1296
    %v1400 = vpop.f32.mrb[0].mxu0
    %v1401 = vadd.f32 %v1051, %v1400
    %v1402 = vpop.f32.mrb[0].mxu0
    %v1403 = vpop.f32.mrb[0].mxu0
    %v1404 = vadd.f32 %v1056, %v1403
    %v1405 = vpop.f32.mrb[0].mxu0
    %1406 = vmatprep.mubr.bf16.mxu0 %v1299
    %1407 = vmatmul.mubr.bf16.gmra.mrb[0].mxu0 %v1298
    %v1408 = vpop.f32.mrb[0].mxu0
    %v1409 = vadd.f32 %v1061, %v1408
    %v1410 = vpop.f32.mrb[0].mxu0
    %v1411 = vpop.f32.mrb[0].mxu0
    %v1412 = vadd.f32 %v1066, %v1411
    %v1413 = vpop.f32.mrb[0].mxu0
    %1414 = vmatprep.mubr.bf16.mxu0 %v1301
    %1415 = vmatmul.mubr.bf16.gmra.mrb[0].mxu0 %v1300
    %v1416 = vpop.f32.mrb[0].mxu0
    %v1417 = vadd.f32 %v1071, %v1416
    %v1418 = vpop.f32.mrb[0].mxu0
    %v1419 = vpop.f32.mrb[0].mxu0
    %v1420 = vadd.f32 %v1076, %v1419
    %v1421 = vpop.f32.mrb[0].mxu0
    %1422 = vmatprep.mubr.bf16.mxu0 %v1303
    %1423 = vmatmul.mubr.bf16.gmra.mrb[0].mxu0 %v1302
    %v1424 = vpop.f32.mrb[0].mxu0
    %v1425 = vadd.f32 %v1081, %v1424
    %v1426 = vpop.f32.mrb[0].mxu0
    %v1427 = vpop.f32.mrb[0].mxu0
    %v1428 = vadd.f32 %v1086, %v1427
    %v1429 = vpop.f32.mrb[0].mxu0
    %1430 = vmatprep.mubr.bf16.mxu0 %v1305
    %1431 = vmatmul.mubr.bf16.gmra.mrb[0].mxu0 %v1304
    %v1432 = vpop.f32.mrb[0].mxu0
    %v1433 = vadd.f32 %v1091, %v1432
    %v1434 = vpop.f32.mrb[0].mxu0
    %v1435 = vpop.f32.mrb[0].mxu0
    %v1436 = vadd.f32 %v1096, %v1435
    %v1437 = vpop.f32.mrb[0].mxu0
    %1438 = vmatprep.mubr.bf16.mxu0 %v1307
    %1439 = vmatmul.mubr.bf16.gmra.mrb[0].mxu0 %v1306
    %v1440 = vpop.f32.mrb[0].mxu0
    %v1441 = vadd.f32 %v1101, %v1440
    %v1442 = vpop.f32.mrb[0].mxu0
    %v1443 = vpop.f32.mrb[0].mxu0
    %v1444 = vadd.f32 %v1106, %v1443
    %v1445 = vpop.f32.mrb[0].mxu0
    %1446 = vmatprep.mubr.bf16.mxu0 %v1309
    %1447 = vmatmul.mubr.bf16.gmra.mrb[0].mxu0 %v1308
    %v1448 = vpop.f32.mrb[0].mxu0
    %v1449 = vadd.f32 %v1111, %v1448
    %v1450 = vpop.f32.mrb[0].mxu0
    %v1451 = vpop.f32.mrb[0].mxu0
    %v1452 = vadd.f32 %v1116, %v1451
    %v1453 = vpop.f32.mrb[0].mxu0
    %1454 = vmatprep.mubr.bf16.mxu0 %v1311
    %1455 = vmatmul.mubr.bf16.gmra.mrb[0].mxu0 %v1310
    %v1456 = vpop.f32.mrb[0].mxu0
    %v1457 = vadd.f32 %v1121, %v1456
    %v1458 = vpop.f32.mrb[0].mxu0
    %v1459 = vpop.f32.mrb[0].mxu0
    %v1460 = vadd.f32 %v1126, %v1459
    %v1461 = vpop.f32.mrb[0].mxu0
    %1462 = vmatprep.mubr.bf16.mxu0 %v1313
    %1463 = vmatmul.mubr.bf16.gmra.mrb[0].mxu0 %v1312
    %v1464 = vpop.f32.mrb[0].mxu0
    %v1465 = vadd.f32 %v1131, %v1464
    %v1466 = vpop.f32.mrb[0].mxu0
    %v1467 = vpop.f32.mrb[0].mxu0
    %v1468 = vadd.f32 %v1136, %v1467
    %v1469 = vpop.f32.mrb[0].mxu0
    %1470 = vmatprep.mubr.bf16.mxu0 %v1315
    %1471 = vmatmul.mubr.bf16.gmra.mrb[0].mxu0 %v1314
    %v1472 = vpop.f32.mrb[0].mxu0
    %v1473 = vadd.f32 %v1141, %v1472
    %v1474 = vpop.f32.mrb[0].mxu0
    %v1475 = vpop.f32.mrb[0].mxu0
    %v1476 = vadd.f32 %v1146, %v1475
    %v1477 = vpop.f32.mrb[0].mxu0
    %1478 = vmatprep.mubr.bf16.mxu0 %v1317
    %1479 = vmatmul.mubr.bf16.gmra.mrb[0].mxu0 %v1316
    %v1480 = vpop.f32.mrb[0].mxu0
    %v1481 = vadd.f32 %v1151, %v1480
    %v1482 = vpop.f32.mrb[0].mxu0
    %v1483 = vpop.f32.mrb[0].mxu0
    %v1484 = vadd.f32 %v1156, %v1483
    %v1485 = vpop.f32.mrb[0].mxu0
    %1486 = vmatprep.mubr.bf16.mxu0 %v1319
    %1487 = vmatmul.mubr.bf16.gmra.mrb[0].mxu0 %v1318
    %v1488 = vpop.f32.mrb[0].mxu0
    %v1489 = vadd.f32 %v1161, %v1488
    %v1490 = vpop.f32.mrb[0].mxu0
    %v1491 = vpop.f32.mrb[0].mxu0
    %v1492 = vadd.f32 %v1166, %v1491
    %v1493 = vpop.f32.mrb[0].mxu0
    %1494 = vmatprep.mubr.bf16.mxu0 %v1321
    %1495 = vmatmul.mubr.bf16.gmra.mrb[0].mxu0 %v1320
    %v1496 = vpop.f32.mrb[0].mxu0
    %v1497 = vadd.f32 %v1171, %v1496
    %v1498 = vpop.f32.mrb[0].mxu0
    %v1499 = vpop.f32.mrb[0].mxu0
    %v1500 = vadd.f32 %v1176, %v1499
    %v1501 = vpop.f32.mrb[0].mxu0
    %1502 = vmatprep.mubr.bf16.mxu0 %v1323
    %1503 = vmatmul.mubr.bf16.gmra.mrb[0].mxu0 %v1322
    %v1504 = vpop.f32.mrb[0].mxu0
    %v1505 = vadd.f32 %v1181, %v1504
    %v1506 = vpop.f32.mrb[0].mxu0
    %v1507 = vpop.f32.mrb[0].mxu0
    %v1508 = vadd.f32 %v1186, %v1507
    %v1509 = vpop.f32.mrb[0].mxu0
    %1510 = vmatprep.mubr.bf16.mxu0 %v1325
    %1511 = vmatmul.mubr.bf16.gmra.mrb[0].mxu0 %v1324
    %v1512 = vpop.f32.mrb[0].mxu0
    %v1513 = vadd.f32 %v1191, %v1512
    %v1514 = vpop.f32.mrb[0].mxu0
    %v1515 = vpop.f32.mrb[0].mxu0
    %v1516 = vadd.f32 %v1196, %v1515
    %v1517 = vpop.f32.mrb[0].mxu0
    %1518 = vdwg.mxu0
    %v1519 = vmax.f32 %v1393, 0.0
    %v1520 = vmax.f32 %v1396, 0.0
    %v1521 = vmax.f32 %v1401, 0.0
    %v1522 = vmax.f32 %v1404, 0.0
    %v1523 = vmax.f32 %v1409, 0.0
    %v1524 = vmax.f32 %v1412, 0.0
    %v1525 = vmax.f32 %v1417, 0.0
    %v1526 = vmax.f32 %v1420, 0.0
    %v1527 = vmax.f32 %v1425, 0.0
    %v1528 = vmax.f32 %v1428, 0.0
    %v1529 = vmax.f32 %v1433, 0.0
    %v1530 = vmax.f32 %v1436, 0.0
    %v1531 = vmax.f32 %v1441, 0.0
    %v1532 = vmax.f32 %v1444, 0.0
    %v1533 = vmax.f32 %v1449, 0.0
    %v1534 = vmax.f32 %v1452, 0.0
    %v1535 = vmax.f32 %v1457, 0.0
    %v1536 = vmax.f32 %v1460, 0.0
    %v1537 = vmax.f32 %v1465, 0.0
    %v1538 = vmax.f32 %v1468, 0.0
    %v1539 = vmax.f32 %v1473, 0.0
    %v1540 = vmax.f32 %v1476, 0.0
    %v1541 = vmax.f32 %v1481, 0.0
    %v1542 = vmax.f32 %v1484, 0.0
    %v1543 = vmax.f32 %v1489, 0.0
    %v1544 = vmax.f32 %v1492, 0.0
    %v1545 = vmax.f32 %v1497, 0.0
    %v1546 = vmax.f32 %v1500, 0.0
    %v1547 = vmax.f32 %v1505, 0.0
    %v1548 = vmax.f32 %v1508, 0.0
    %v1549 = vmax.f32 %v1513, 0.0
    %v1550 = vmax.f32 %v1516, 0.0
    %v1551 = vld [vmem:[%s7] sm:$0xff]
    %v1552 = vld [vmem:[%s7 + $0x8] sm:$0xff]
    %v1553 = vld [vmem:[%s7 + $0x10] sm:$0xff]
    %v1554 = vld [vmem:[%s7 + $0x18] sm:$0xff]
    %v1555 = vld [vmem:[%s7 + $0x20] sm:$0xff]
    %v1556 = vld [vmem:[%s7 + $0x28] sm:$0xff]
    %v1557 = vld [vmem:[%s7 + $0x30] sm:$0xff]
    %v1558 = vld [vmem:[%s7 + $0x38] sm:$0xff]
    %v1559 = vld [vmem:[%s7 + $0x40] sm:$0xff]
    %v1560 = vld [vmem:[%s7 + $0x48] sm:$0xff]
    %v1561 = vld [vmem:[%s7 + $0x50] sm:$0xff]
    %v1562 = vld [vmem:[%s7 + $0x58] sm:$0xff]
    %v1563 = vld [vmem:[%s7 + $0x60] sm:$0xff]
    %v1564 = vld [vmem:[%s7 + $0x68] sm:$0xff]
    %v1565 = vld [vmem:[%s7 + $0x70] sm:$0xff]
    %v1566 = vld [vmem:[%s7 + $0x78] sm:$0xff]
    %v1567 = vld [vmem:[%s7 + $0x80] sm:$0xff]
    %v1568 = vld [vmem:[%s7 + $0x88] sm:$0xff]
    %v1569 = vld [vmem:[%s7 + $0x90] sm:$0xff]
    %v1570 = vld [vmem:[%s7 + $0x98] sm:$0xff]
    %v1571 = vld [vmem:[%s7 + $0xa0] sm:$0xff]
    %v1572 = vld [vmem:[%s7 + $0xa8] sm:$0xff]
    %v1573 = vld [vmem:[%s7 + $0xb0] sm:$0xff]
    %v1574 = vld [vmem:[%s7 + $0xb8] sm:$0xff]
    %v1575 = vld [vmem:[%s7 + $0xc0] sm:$0xff]
    %v1576 = vld [vmem:[%s7 + $0xc8] sm:$0xff]
    %v1577 = vld [vmem:[%s7 + $0xd0] sm:$0xff]
    %v1578 = vld [vmem:[%s7 + $0xd8] sm:$0xff]
    %v1579 = vld [vmem:[%s7 + $0xe0] sm:$0xff]
    %v1580 = vld [vmem:[%s7 + $0xe8] sm:$0xff]
    %v1581 = vld [vmem:[%s7 + $0xf0] sm:$0xff]
    %v1582 = vld [vmem:[%s7 + $0xf8] sm:$0xff]
    %1584 = vset.pattern.permute.xlu0 0
    %1585 = vperm.xlu0 %1584, %v1551
    %v1586 = vpop.permute.xlu0 %1585
    %1589 = vset.pattern.permute.xlu0 0
    %1590 = vperm.xlu0 %1589, %v1552
    %v1591 = vpop.permute.xlu0 %1590
    %1594 = vset.pattern.permute.xlu0 0
    %1595 = vperm.xlu0 %1594, %v1553
    %v1596 = vpop.permute.xlu0 %1595
    %1599 = vset.pattern.permute.xlu0 0
    %1600 = vperm.xlu0 %1599, %v1554
    %v1601 = vpop.permute.xlu0 %1600
    %1604 = vset.pattern.permute.xlu0 0
    %1605 = vperm.xlu0 %1604, %v1555
    %v1606 = vpop.permute.xlu0 %1605
    %1609 = vset.pattern.permute.xlu0 0
    %1610 = vperm.xlu0 %1609, %v1556
    %v1611 = vpop.permute.xlu0 %1610
    %1614 = vset.pattern.permute.xlu0 0
    %1615 = vperm.xlu0 %1614, %v1557
    %v1616 = vpop.permute.xlu0 %1615
    %1619 = vset.pattern.permute.xlu0 0
    %1620 = vperm.xlu0 %1619, %v1558
    %v1621 = vpop.permute.xlu0 %1620
    %1624 = vset.pattern.permute.xlu0 0
    %1625 = vperm.xlu0 %1624, %v1559
    %v1626 = vpop.permute.xlu0 %1625
    %1629 = vset.pattern.permute.xlu0 0
    %1630 = vperm.xlu0 %1629, %v1560
    %v1631 = vpop.permute.xlu0 %1630
    %1634 = vset.pattern.permute.xlu0 0
    %1635 = vperm.xlu0 %1634, %v1561
    %v1636 = vpop.permute.xlu0 %1635
    %1639 = vset.pattern.permute.xlu0 0
    %1640 = vperm.xlu0 %1639, %v1562
    %v1641 = vpop.permute.xlu0 %1640
    %1644 = vset.pattern.permute.xlu0 0
    %1645 = vperm.xlu0 %1644, %v1563
    %v1646 = vpop.permute.xlu0 %1645
    %1649 = vset.pattern.permute.xlu0 0
    %1650 = vperm.xlu0 %1649, %v1564
    %v1651 = vpop.permute.xlu0 %1650
    %1654 = vset.pattern.permute.xlu0 0
    %1655 = vperm.xlu0 %1654, %v1565
    %v1656 = vpop.permute.xlu0 %1655
    %1659 = vset.pattern.permute.xlu0 0
    %1660 = vperm.xlu0 %1659, %v1566
    %v1661 = vpop.permute.xlu0 %1660
    %1664 = vset.pattern.permute.xlu0 0
    %1665 = vperm.xlu0 %1664, %v1567
    %v1666 = vpop.permute.xlu0 %1665
    %1669 = vset.pattern.permute.xlu0 0
    %1670 = vperm.xlu0 %1669, %v1568
    %v1671 = vpop.permute.xlu0 %1670
    %1674 = vset.pattern.permute.xlu0 0
    %1675 = vperm.xlu0 %1674, %v1569
    %v1676 = vpop.permute.xlu0 %1675
    %1679 = vset.pattern.permute.xlu0 0
    %1680 = vperm.xlu0 %1679, %v1570
    %v1681 = vpop.permute.xlu0 %1680
    %1684 = vset.pattern.permute.xlu0 0
    %1685 = vperm.xlu0 %1684, %v1571
    %v1686 = vpop.permute.xlu0 %1685
    %1689 = vset.pattern.permute.xlu0 0
    %1690 = vperm.xlu0 %1689, %v1572
    %v1691 = vpop.permute.xlu0 %1690
    %1694 = vset.pattern.permute.xlu0 0
    %1695 = vperm.xlu0 %1694, %v1573
    %v1696 = vpop.permute.xlu0 %1695
    %1699 = vset.pattern.permute.xlu0 0
    %1700 = vperm.xlu0 %1699, %v1574
    %v1701 = vpop.permute.xlu0 %1700
    %1704 = vset.pattern.permute.xlu0 0
    %1705 = vperm.xlu0 %1704, %v1575
    %v1706 = vpop.permute.xlu0 %1705
    %1709 = vset.pattern.permute.xlu0 0
    %1710 = vperm.xlu0 %1709, %v1576
    %v1711 = vpop.permute.xlu0 %1710
    %1714 = vset.pattern.permute.xlu0 0
    %1715 = vperm.xlu0 %1714, %v1577
    %v1716 = vpop.permute.xlu0 %1715
    %1719 = vset.pattern.permute.xlu0 0
    %1720 = vperm.xlu0 %1719, %v1578
    %v1721 = vpop.permute.xlu0 %1720
    %1724 = vset.pattern.permute.xlu0 0
    %1725 = vperm.xlu0 %1724, %v1579
    %v1726 = vpop.permute.xlu0 %1725
    %1729 = vset.pattern.permute.xlu0 0
    %1730 = vperm.xlu0 %1729, %v1580
    %v1731 = vpop.permute.xlu0 %1730
    %1734 = vset.pattern.permute.xlu0 0
    %1735 = vperm.xlu0 %1734, %v1581
    %v1736 = vpop.permute.xlu0 %1735
    %1739 = vset.pattern.permute.xlu0 0
    %1740 = vperm.xlu0 %1739, %v1582
    %v1741 = vpop.permute.xlu0 %1740
    %v1743 = vmul.f32 %v1519, %v1586
    %v1744 = vmul.f32 %v1520, %v1591
    %v1745 = vmul.f32 %v1521, %v1596
    %v1746 = vmul.f32 %v1522, %v1601
    %v1747 = vmul.f32 %v1523, %v1606
    %v1748 = vmul.f32 %v1524, %v1611
    %v1749 = vmul.f32 %v1525, %v1616
    %v1750 = vmul.f32 %v1526, %v1621
    %v1751 = vmul.f32 %v1527, %v1626
    %v1752 = vmul.f32 %v1528, %v1631
    %v1753 = vmul.f32 %v1529, %v1636
    %v1754 = vmul.f32 %v1530, %v1641
    %v1755 = vmul.f32 %v1531, %v1646
    %v1756 = vmul.f32 %v1532, %v1651
    %v1757 = vmul.f32 %v1533, %v1656
    %v1758 = vmul.f32 %v1534, %v1661
    %v1759 = vmul.f32 %v1535, %v1666
    %v1760 = vmul.f32 %v1536, %v1671
    %v1761 = vmul.f32 %v1537, %v1676
    %v1762 = vmul.f32 %v1538, %v1681
    %v1763 = vmul.f32 %v1539, %v1686
    %v1764 = vmul.f32 %v1540, %v1691
    %v1765 = vmul.f32 %v1541, %v1696
    %v1766 = vmul.f32 %v1542, %v1701
    %v1767 = vmul.f32 %v1543, %v1706
    %v1768 = vmul.f32 %v1544, %v1711
    %v1769 = vmul.f32 %v1545, %v1716
    %v1770 = vmul.f32 %v1546, %v1721
    %v1771 = vmul.f32 %v1547, %v1726
    %v1772 = vmul.f32 %v1548, %v1731
    %v1773 = vmul.f32 %v1549, %v1736
    %v1774 = vmul.f32 %v1550, %v1741
    %vm1775 = vcmask 64512
    %v1776 = vsel %vm1775, %v1743, 0.0
    %v1777 = vsel %vm1775, %v1744, 0.0
    %v1778 = vadd.f32 %v1776, %v1777
    %v1779 = vsel %vm1775, %v1745, 0.0
    %v1780 = vadd.f32 %v1778, %v1779
    %v1781 = vsel %vm1775, %v1746, 0.0
    %v1782 = vadd.f32 %v1780, %v1781
    %v1783 = vsel %vm1775, %v1747, 0.0
    %v1784 = vadd.f32 %v1782, %v1783
    %v1785 = vsel %vm1775, %v1748, 0.0
    %v1786 = vadd.f32 %v1784, %v1785
    %v1787 = vsel %vm1775, %v1749, 0.0
    %v1788 = vadd.f32 %v1786, %v1787
    %v1789 = vsel %vm1775, %v1750, 0.0
    %v1790 = vadd.f32 %v1788, %v1789
    %v1791 = vsel %vm1775, %v1751, 0.0
    %v1792 = vadd.f32 %v1790, %v1791
    %v1793 = vsel %vm1775, %v1752, 0.0
    %v1794 = vadd.f32 %v1792, %v1793
    %v1795 = vsel %vm1775, %v1753, 0.0
    %v1796 = vadd.f32 %v1794, %v1795
    %v1797 = vsel %vm1775, %v1754, 0.0
    %v1798 = vadd.f32 %v1796, %v1797
    %v1799 = vsel %vm1775, %v1755, 0.0
    %v1800 = vadd.f32 %v1798, %v1799
    %v1801 = vsel %vm1775, %v1756, 0.0
    %v1802 = vadd.f32 %v1800, %v1801
    %v1803 = vsel %vm1775, %v1757, 0.0
    %v1804 = vadd.f32 %v1802, %v1803
    %v1805 = vsel %vm1775, %v1758, 0.0
    %v1806 = vadd.f32 %v1804, %v1805
    %v1807 = vsel %vm1775, %v1759, 0.0
    %v1808 = vadd.f32 %v1806, %v1807
    %v1809 = vsel %vm1775, %v1760, 0.0
    %v1810 = vadd.f32 %v1808, %v1809
    %v1811 = vsel %vm1775, %v1761, 0.0
    %v1812 = vadd.f32 %v1810, %v1811
    %v1813 = vsel %vm1775, %v1762, 0.0
    %v1814 = vadd.f32 %v1812, %v1813
    %v1815 = vsel %vm1775, %v1763, 0.0
    %v1816 = vadd.f32 %v1814, %v1815
    %v1817 = vsel %vm1775, %v1764, 0.0
    %v1818 = vadd.f32 %v1816, %v1817
    %v1819 = vsel %vm1775, %v1765, 0.0
    %v1820 = vadd.f32 %v1818, %v1819
    %v1821 = vsel %vm1775, %v1766, 0.0
    %v1822 = vadd.f32 %v1820, %v1821
    %v1823 = vsel %vm1775, %v1767, 0.0
    %v1824 = vadd.f32 %v1822, %v1823
    %v1825 = vsel %vm1775, %v1768, 0.0
    %v1826 = vadd.f32 %v1824, %v1825
    %v1827 = vsel %vm1775, %v1769, 0.0
    %v1828 = vadd.f32 %v1826, %v1827
    %v1829 = vsel %vm1775, %v1770, 0.0
    %v1830 = vadd.f32 %v1828, %v1829
    %v1831 = vsel %vm1775, %v1771, 0.0
    %v1832 = vadd.f32 %v1830, %v1831
    %v1833 = vsel %vm1775, %v1772, 0.0
    %v1834 = vadd.f32 %v1832, %v1833
    %v1835 = vsel %vm1775, %v1773, 0.0
    %v1836 = vadd.f32 %v1834, %v1835
    %v1837 = vsel %vm1775, %v1774, 0.0
    %v1838 = vadd.f32 %v1836, %v1837
    %v1839 = vrot.slane %v1838, 4
    %v1840 = vadd.f32 %v1838, %v1839
    %v1841 = vrot.slane %v1840, 2
    %v1842 = vadd.f32 %v1840, %v1841
    %v1843 = vrot.slane %v1842, 1
    %v1844 = vadd.f32 %v1842, %v1843
    %v1845 = vld [vmem:[#allocation2] sm:$0x1]
    %1847 = vset.pattern.permute.xlu0 0
    %1848 = vperm.xlu0 %1847, %v1845
    %v1849 = vpop.permute.xlu0 %1848
    %v1851 = vlaneseq
    %v1852 = vshrl.u32 %v1851, 7
    %v1853 = vsub.s32 0, %v1852
    %v1854 = vrot.slane %v1849, %v1853
    %v1855 = vadd.f32 %v1844, %v1854
    %vm1856 = vcmask 57344
    %1857 = vst.msk [vmem:[#allocation3] sm:$0x1] %vm1856, %v1855
    // Predicated region
    $region38: #{tpu_custom_call.1} parent=1 // pred_check
      _
    $region39: #{tpu_custom_call.1} parent=1 // pred_check_branch
      %1859 = sbr.rel (0) target = $region41
    $region40: #{tpu_custom_call.1} parent=1 // pred_region
      %s1861 = ssub.s32 16, 16
      %1862 = vsyncadd [#allocation4], %s1861
      %s1864 = sshll.u32 [#allocation3], 4
      %s1865 = int_to_ptr.vmem [resolvable:$true] %s1864
      %1867 = dma.vmem_to_hbm [thread:$0]  %s1865, 16, %s9, [#allocation4]
    $region41: #{tpu_custom_call.1} parent=1 // pred_fallthru
      _
    // Predicated region
    $region42: #{tpu_custom_call.1} parent=1 // pred_check
      _
    $region43: #{tpu_custom_call.1} parent=1 // pred_check_branch
      %1869 = sbr.rel (0) target = $region45
    $region44: #{tpu_custom_call.1} parent=1 // pred_region
      %1870 = dma.done [#allocation4], 16
    $region45: #{tpu_custom_call.1} parent=1 // pred_fallthru
      _
    %1871 = vsyncpa [#allocation4], 1

</llo_original>
